<compile_context>
chip_gen: v5e
topology: v5e:2x2
jax: 0.10.0
libtpu: 0.0.40
codegen_flags: <defaults>
</compile_context>

<pallas_src>
import jax
import jax.numpy as jnp
from jax.experimental import pallas as pl
from jax.experimental.pallas import tpu as pltpu

EPS = 1e-5  # nn.BatchNorm2d default


def _round_up(x, m):
    return (x + m - 1) // m * m


# --------------------------------------------------------------------------------------
# Pass 1: ConvTranspose(3,1,1) expressed as a 3x3 conv (+bias) on haloed row tiles,
#          plus per-tile per-channel (sum, shifted sum-of-squares) BatchNorm partials.
# --------------------------------------------------------------------------------------
def _make_conv_kernel(per_tap: bool, k_pad: int):
    def kernel(x_ref, halo_ref, w_ref, b_ref, conv_ref, stats_ref):
        # x_ref:    (TH, W+2, Cin) bf16   body rows of the W-padded NHWC activation
        # halo_ref: (2,  W+2, Cin) bf16   row above / row below this tile (zeros at image edges)
        # w_ref:    per_tap: (9, Cin, TCO) bf16 ; else (K_pad, TCO) bf16 (taps stacked along K)
        # b_ref:    (1, TCO) f32          ConvTranspose bias
        # conv_ref: (TH*W, TCO) bf16      conv+bias intermediate (stats come from the fp32 acc)
        # stats_ref:(2, TCO) f32          [sum(z), sum((z - tile_mean)^2)]
        th, wp2, cin = x_ref.shape
        w = wp2 - 2
        tpix = th * w

        # Assemble the (TH+2, W+2, Cin) haloed window in VMEM (outer-dim concat; overlaps the MXU).
        xx = jnp.concatenate([halo_ref[0:1, :, :], x_ref[...], halo_ref[1:2, :, :]], axis=0)

        if per_tap:
            # Large Cin: 9 accumulating MXU dots (K = Cin). No im2col temp; MRB/fp32-acc friendly.
            acc = None
            for dh in range(3):
                for dw in range(3):
                    k = dh * 3 + dw
                    tap = xx[dh:dh + th, dw:dw + w, :].reshape(tpix, cin)
                    part = jnp.dot(tap, w_ref[k], preferred_element_type=jnp.float32)
                    acc = part if acc is None else acc + part
        else:
            # Small Cin: a single fused dot with combined K = 9*Cin padded to a lane multiple
            # (channels themselves are NOT padded to 128, so no HBM inflation for the stem).
            taps = [xx[dh:dh + th, dw:dw + w, :] for dh in range(3) for dw in range(3)]
            im2col = jnp.concatenate(taps, axis=-1).reshape(tpix, 9 * cin)
            if k_pad > 9 * cin:
                im2col = jnp.concatenate(
                    [im2col, jnp.zeros((tpix, k_pad - 9 * cin), im2col.dtype)], axis=-1)
            acc = jnp.dot(im2col, w_ref[...], preferred_element_type=jnp.float32)

        z = acc + b_ref[...]                        # fp32 accumulator + ConvTranspose bias
        conv_ref[...] = z.astype(conv_ref.dtype)    # bf16 intermediate to HBM (halves the round-trip)
        s = jnp.sum(z, axis=0, keepdims=True)
        d = z - s * (1.0 / tpix)                    # shifted moment: avoids E[z^2]-E[z]^2 cancellation
        stats_ref[0:1, :] = s
        stats_ref[1:2, :] = jnp.sum(d * d, axis=0, keepdims=True)

    return kernel


# --------------------------------------------------------------------------------------
# Pass 2: fused BatchNorm scale/shift + ReLU over lane-dense (TP2, Cout_p) tiles.
# --------------------------------------------------------------------------------------
def _bn_relu_kernel(z_ref, scale_ref, shift_ref, o_ref):
    y = z_ref[...].astype(jnp.float32) * scale_ref[...] + shift_ref[...]
    o_ref[...] = jnp.maximum(y, 0.0).astype(o_ref.dtype)


# --------------------------------------------------------------------------------------
# Tile selection / VMEM budget (honest, per grid step, double-buffered operands).
# --------------------------------------------------------------------------------------
def _vmem_need(th, w, cin, tco, per_tap, k_pad):
    bf, f32 = 2, 4
    tpix = th * w
    wp2 = _round_up(w + 2, 8)
    x_t = th * wp2 * cin * bf
    halo = 2 * wp2 * cin * bf
    wgt = (9 * _round_up(cin, 8) if per_tap else k_pad) * tco * bf
    bias = 8 * tco * f32
    conv = tpix * tco * bf
    stats = 8 * tco * f32
    xx = (th + 2) * wp2 * cin * bf
    acc = tpix * tco * f32
    tmp = tpix * (cin if per_tap else k_pad) * bf
    return 2 * (x_t + halo + wgt + bias + conv + stats) + xx + acc + tmp + (2 << 20)


def _choose_tiles(H, W, Cin, Cout_p, per_tap, k_pad, phys, pix_cap=None, cout_tile=None):
    budget = int(phys * 0.5)                                 # headroom for Mosaic internal scratch
    if pix_cap is None:
        # 128-MiB VMEM parts (v5e/v6e) can take ~2x larger pixel tiles than v7x (64 MiB).
        pix_cap = 2048 if phys >= 96 * 2**20 else 1024
    ths = [t for t in range(H, 0, -1) if H % t == 0 and t * W <= pix_cap] or [1]
    if cout_tile is not None and Cout_p % cout_tile == 0:
        tcos = [cout_tile]
    else:
        tcos = list(dict.fromkeys(
            c for c in (Cout_p, 512, 256, 128) if c <= Cout_p and Cout_p % c == 0))
    for tco in tcos:                                          # prefer whole-Cout tiles (resident weight)
        for th in ths:                                        # prefer the largest row tile that fits
            if _vmem_need(th, W, Cin, tco, per_tap, k_pad) <= budget:
                return th, tco
    return ths[-1], tcos[-1]


# --------------------------------------------------------------------------------------
# Forward pass wrappers.
# --------------------------------------------------------------------------------------
def vgg_conv_transpose_nhwc(x_nhwc, w_t, bias, gamma, beta, *, out_dtype=jnp.float32,
                            pix_cap=None, cout_tile=None):
    """ConvTranspose2d(3,1,1) + BatchNorm2d(training) + ReLU.

    x_nhwc: (N, H, W, Cin); w_t: (Cin, Cout, 3, 3) PyTorch ConvTranspose2d weight; bias/gamma/beta:
    (Cout,). Returns (N, H, W, Cout) NHWC (preferred entry point when chaining layers)."""
    N, H, W, Cin = x_nhwc.shape
    Cout = w_t.shape[1]
    Cout_p = _round_up(Cout, 128)
    per_tap = Cin >= 128
    k_pad = 9 * Cin if per_tap else _round_up(9 * Cin, 128)

    try:
        phys = int(pltpu.get_tpu_info().vmem_capacity_bytes)
    except Exception:
        phys = 64 * 1024 * 1024

    TH, TCO = _choose_tiles(H, W, Cin, Cout_p, per_tap, k_pad, phys, pix_cap, cout_tile)
    nt = H // TH
    G = N * nt
    TPix = TH * W
    n_co = Cout_p // TCO

    # --- input prep: bf16 NHWC + (1,1) zero pad on W only (fuses with the cast); NO H-halo restack
    #     and NO channel padding -> the kernel reads the activation essentially in place. ---
    xw = jnp.pad(x_nhwc.astype(jnp.bfloat16), ((0, 0), (0, 0), (1, 1), (0, 0)))   # (N, H, W+2, Cin)
    x_body = xw.reshape(G, TH, W + 2, Cin)                                        # free reshape
    # 2 halo rows per row tile (zeros at the image top/bottom): ~2/TH of one activation pass.
    zrow = jnp.zeros((N, 1, W + 2, Cin), jnp.bfloat16)
    if nt > 1:
        top = jnp.concatenate([zrow, xw[:, TH - 1:H - 1:TH]], axis=1)             # (N, nt, W+2, Cin)
        bot = jnp.concatenate([xw[:, TH:H:TH], zrow], axis=1)                     # (N, nt, W+2, Cin)
    else:
        top = bot = zrow
    halo = jnp.stack([top, bot], axis=2).reshape(G, 2, W + 2, Cin)

    # --- ConvTranspose2d(3,1,1) == Conv2d(3,1,1) with flipped taps & swapped channel axes ---
    w_conv = jnp.transpose(jnp.flip(w_t, axis=(2, 3)), (2, 3, 0, 1))              # (3, 3, Cin, Cout)
    w_conv = jnp.pad(w_conv, ((0, 0), (0, 0), (0, 0), (0, Cout_p - Cout))).astype(jnp.bfloat16)
    if per_tap:
        wk = w_conv.reshape(9, Cin, Cout_p)
        w_block = (9, Cin, TCO)
    else:
        wk = jnp.pad(w_conv.reshape(9 * Cin, Cout_p), ((0, k_pad - 9 * Cin), (0, 0)))
        w_block = (k_pad, TCO)
    bias_p = jnp.pad(bias.astype(jnp.float32), (0, Cout_p - Cout)).reshape(1, Cout_p)

    need = _vmem_need(TH, W, Cin, TCO, per_tap, k_pad)
    vmem_limit = int(min(max(need, 32 * 1024 * 1024), int(phys * 0.9)))
    # 3-deep input pipelining for memory-bound small-Cin layers with enough steps & VMEM headroom.
    deep_x = (not per_tap) and G >= 8 and (need + TH * (W + 2) * Cin * 2) <= int(phys * 0.5)

    if n_co == 1:
        grid = (G,)
        dims = ("parallel",)
        gmap = lambda g: (g, 0, 0, 0)
        cmap = lambda g: (0, 0)
        wmap = (lambda g: (0, 0, 0)) if per_tap else (lambda g: (0, 0))
        omap = lambda g: (g, 0, 0)
    else:
        # Cout-tile index on the OUTER axis -> the weight/bias blocks stay resident in VMEM across
        # the whole inner g sweep (no per-step weight re-DMA); x tiles are re-read n_co (<=4) times.
        grid = (n_co, G)
        dims = ("parallel", "parallel")
        gmap = lambda co, g: (g, 0, 0, 0)
        cmap = lambda co, g: (0, co)
        wmap = (lambda co, g: (0, 0, co)) if per_tap else (lambda co, g: (0, co))
        omap = lambda co, g: (g, 0, co)

    x_spec = (pl.BlockSpec((None, TH, W + 2, Cin), gmap, pipeline_mode=pl.Buffered(3))
              if deep_x else pl.BlockSpec((None, TH, W + 2, Cin), gmap))

    conv_out, stats = pl.pallas_call(
        _make_conv_kernel(per_tap, k_pad),
        out_shape=(jax.ShapeDtypeStruct((G, TPix, Cout_p), jnp.bfloat16),
                   jax.ShapeDtypeStruct((G, 2, Cout_p), jnp.float32)),
        grid=grid,
        in_specs=[
            x_spec,
            pl.BlockSpec((None, 2, W + 2, Cin), gmap),
            pl.BlockSpec(w_block, wmap),
            pl.BlockSpec((1, TCO), cmap),
        ],
        out_specs=(
            pl.BlockSpec((None, TPix, TCO), omap),
            pl.BlockSpec((None, 2, TCO), omap),
        ),
        compiler_params=pltpu.CompilerParams(
            dimension_semantics=dims, vmem_limit_bytes=vmem_limit),
    )(x_body, halo, wk, bias_p)

    # --- global BN combine (tiny, per-channel, Chan's parallel-variance formula) ---
    cnt = jnp.float32(G * TPix)                               # == N*H*W
    tile_sum = stats[:, 0, :]                                 # (G, Cout_p)
    mean = jnp.sum(tile_sum, axis=0) / cnt
    m_t = tile_sum / jnp.float32(TPix)
    m2 = jnp.sum(stats[:, 1, :], axis=0) + jnp.float32(TPix) * jnp.sum((m_t - mean) ** 2, axis=0)
    var = jnp.maximum(m2 / cnt, 0.0)
    gamma_p = jnp.pad(gamma.astype(jnp.float32), (0, Cout_p - Cout))
    beta_p = jnp.pad(beta.astype(jnp.float32), (0, Cout_p - Cout))
    scale = gamma_p * jax.lax.rsqrt(var + EPS)
    shift = beta_p - mean * scale
    # TODO(synk): nn.BatchNorm2d running_mean/running_var in-place updates are not emitted; a caller
    # can use `mean` and the unbiased `var * cnt / (cnt - 1)` above if that side effect is needed.

    # --- pass 2: single FMA + ReLU over lane-dense (TP2, Cout_p) tiles ---
    P = G * TPix
    conv_flat = conv_out.reshape(P, Cout_p)
    row_bytes = Cout_p * (2 + jnp.dtype(out_dtype).itemsize)
    tp2_cap = 2048 if phys >= 96 * 2**20 else 1024
    tp2_cap = max(8, min(tp2_cap, ((8 << 20) // row_bytes) // 8 * 8))
    cand = [d for d in range(min(P, tp2_cap), 7, -1) if P % d == 0 and d % 8 == 0]
    TP2 = cand[0] if cand else P                              # fallback: whole P as one full-dim block

    out2d = pl.pallas_call(
        _bn_relu_kernel,
        out_shape=jax.ShapeDtypeStruct((P, Cout_p), out_dtype),
        grid=(P // TP2,),
        in_specs=[
            pl.BlockSpec((TP2, Cout_p), lambda i: (i, 0)),
            pl.BlockSpec((1, Cout_p), lambda i: (0, 0)),
            pl.BlockSpec((1, Cout_p), lambda i: (0, 0)),
        ],
        out_specs=pl.BlockSpec((TP2, Cout_p), lambda i: (i, 0)),
        compiler_params=pltpu.CompilerParams(dimension_semantics=("parallel",)),
    )(conv_flat, scale.reshape(1, Cout_p), shift.reshape(1, Cout_p))

    out = out2d.reshape(N, H, W, Cout_p)
    return out[..., :Cout]                                    # no-op when Cout % 128 == 0


def vgg_conv_transpose(x_nchw, w_t, bias, gamma, beta, **kwargs):
    """NCHW adapter (PyTorch parity). For chained layers prefer vgg_conv_transpose_nhwc and keep
    activations NHWC so the relayout happens only at network boundaries."""
    x_nhwc = jnp.transpose(x_nchw, (0, 2, 3, 1))
    y = vgg_conv_transpose_nhwc(x_nhwc, w_t, bias, gamma, beta, **kwargs)
    return jnp.transpose(y, (0, 3, 1, 2))


def ref_forward(x_nchw, w_t, bias, gamma, beta, *, conv_dtype=jnp.float32):
    """Pure-JAX reference: ConvTranspose2d(3,1,1) + BatchNorm2d(train) + ReLU (NCHW).
    conv_dtype=bfloat16 mirrors the kernel's bf16 conv intermediate (BN stats from fp32 conv)."""
    N, Cin, H, W = x_nchw.shape
    Cout = w_t.shape[1]
    full = jnp.zeros((N, Cout, H + 2, W + 2), jnp.float32)
    for kh in range(3):
        for kw in range(3):
            contrib = jnp.einsum("nchw,co->nohw", x_nchw, w_t[:, :, kh, kw])
            full = full.at[:, :, kh:kh + H, kw:kw + W].add(contrib)
    z = full[:, :, 1:1 + H, 1:1 + W] + bias[None, :, None, None]
    mean = z.mean(axis=(0, 2, 3), keepdims=True)
    var = ((z - mean) ** 2).mean(axis=(0, 2, 3), keepdims=True)
    scale = gamma[None, :, None, None] * jax.lax.rsqrt(var + EPS)
    shift = beta[None, :, None, None] - mean * scale
    zq = z.astype(conv_dtype).astype(jnp.float32)
    return jnp.maximum(zq * scale + shift, 0.0)


if __name__ == "__main__":
    # ---- main check (module-sized toy shapes): small-Cin fused-K path, 1-D grid ----
    N, Cin, Cout, H, W = 2, 4, 8, 16, 16
    key = jax.random.PRNGKey(0)
    kx, kw, kb, kg, kbt = jax.random.split(key, 5)
    x = jax.random.normal(kx, (N, Cin, H, W), jnp.float32)
    w_t = jax.random.normal(kw, (Cin, Cout, 3, 3), jnp.float32) * 0.1     # ConvTranspose2d weight
    bias = jax.random.normal(kb, (Cout,), jnp.float32) * 0.1              # ConvTranspose2d bias
    gamma = 1.0 + 0.1 * jax.random.normal(kg, (Cout,), jnp.float32)       # BN weight
    beta = 0.1 * jax.random.normal(kbt, (Cout,), jnp.float32)             # BN bias

    out = jax.block_until_ready(jax.jit(vgg_conv_transpose)(x, w_t, bias, gamma, beta))
    assert out.shape == (N, Cout, H, W), out.shape

    # Reference driven by the same bf16-rounded operands / bf16 conv intermediate the kernel uses
    # (fp32 accumulation on both sides) so the check isolates kernel structure from quantization.
    x_q = x.astype(jnp.bfloat16).astype(jnp.float32)
    w_q = w_t.astype(jnp.bfloat16).astype(jnp.float32)
    ref = ref_forward(x_q, w_q, bias, gamma, beta, conv_dtype=jnp.bfloat16)
    err = jnp.abs(out - ref)
    assert jnp.allclose(out, ref, atol=2.5e-2, rtol=2.5e-2), float(jnp.max(err))
    assert float(jnp.mean(err)) < 1e-3, float(jnp.mean(err))

    # ---- second check: exercises the per-tap (large-Cin) path, multi-row-tile halos and the
    #      2-D (weight-resident, Cout-tiled) grid ----
    N2, Cin2, Cout2, H2, W2 = 1, 128, 256, 16, 16
    kx2, kw2, kb2, kg2, kbt2 = jax.random.split(jax.random.PRNGKey(1), 5)
    x2 = jax.random.normal(kx2, (N2, Cin2, H2, W2), jnp.float32)
    w2 = jax.random.normal(kw2, (Cin2, Cout2, 3, 3), jnp.float32) * 0.05
    b2 = jax.random.normal(kb2, (Cout2,), jnp.float32) * 0.1
    g2 = 1.0 + 0.1 * jax.random.normal(kg2, (Cout2,), jnp.float32)
    bt2 = 0.1 * jax.random.normal(kbt2, (Cout2,), jnp.float32)
    fwd2 = jax.jit(lambda *a: vgg_conv_transpose(*a, pix_cap=128, cout_tile=128))
    out2 = jax.block_until_ready(fwd2(x2, w2, b2, g2, bt2))
    assert out2.shape == (N2, Cout2, H2, W2), out2.shape
    ref2 = ref_forward(x2.astype(jnp.bfloat16).astype(jnp.float32),
                       w2.astype(jnp.bfloat16).astype(jnp.float32),
                       b2, g2, bt2, conv_dtype=jnp.bfloat16)
    err2 = jnp.abs(out2 - ref2)
    assert jnp.allclose(out2, ref2, atol=2.5e-2, rtol=2.5e-2), float(jnp.max(err2))
    assert float(jnp.mean(err2)) < 1.5e-3, float(jnp.mean(err2))

    print("KERNEL_OK")
</pallas_src>

<mosaic_0001>
module attributes {stable_mosaic.version = 11 : i64} {
  func.func @kernel(%arg0: i32, %arg1: memref<1x16x18x4xbf16, #tpu.memory_space<vmem>>, %arg2: memref<1x2x18x4xbf16, #tpu.memory_space<vmem>>, %arg3: memref<128x128xbf16, #tpu.memory_space<vmem>>, %arg4: memref<1x128xf32, #tpu.memory_space<vmem>>, %arg5: memref<1x256x128xbf16, #tpu.memory_space<vmem>>, %arg6: memref<1x2x128xf32, #tpu.memory_space<vmem>>) attributes {dimension_semantics = [#tpu.dimension_semantics<parallel>], iteration_bounds = array<i64: 2>, scalar_prefetch = 0 : i64, scratch_operands = 0 : i64, tpu.core_type = #tpu.core_type<tc>, window_params = [{transform_indices = @transform_0, window_bounds = array<i64: 1, 16, 18, 4>}, {transform_indices = @transform_1, window_bounds = array<i64: 1, 2, 18, 4>}, {pipeline_mode = #tpu.pipeline_mode<synchronous>, transform_indices = @transform_2, window_bounds = array<i64: 128, 128>}, {pipeline_mode = #tpu.pipeline_mode<synchronous>, transform_indices = @transform_3, window_bounds = array<i64: 1, 128>}, {transform_indices = @transform_4, window_bounds = array<i64: 1, 256, 128>}, {transform_indices = @transform_5, window_bounds = array<i64: 1, 2, 128>}]} {
    %c0 = arith.constant 0 : index
    %c0_0 = arith.constant 0 : index
    %c0_1 = arith.constant 0 : index
    %c0_2 = arith.constant 0 : index
    %0 = vector.load %arg2[%c0, %c0_0, %c0_1, %c0_2] : memref<1x2x18x4xbf16, #tpu.memory_space<vmem>>, vector<1x1x18x4xbf16>
    %1 = vector.shape_cast %0 : vector<1x1x18x4xbf16> to vector<1x18x4xbf16>
    %c0_3 = arith.constant 0 : index
    %c0_4 = arith.constant 0 : index
    %c0_5 = arith.constant 0 : index
    %c0_6 = arith.constant 0 : index
    %2 = vector.load %arg1[%c0_3, %c0_4, %c0_5, %c0_6] : memref<1x16x18x4xbf16, #tpu.memory_space<vmem>>, vector<1x16x18x4xbf16>
    %3 = vector.shape_cast %2 : vector<1x16x18x4xbf16> to vector<16x18x4xbf16>
    %c0_7 = arith.constant 0 : index
    %c1 = arith.constant 1 : index
    %c0_8 = arith.constant 0 : index
    %c0_9 = arith.constant 0 : index
    %4 = vector.load %arg2[%c0_7, %c1, %c0_8, %c0_9] : memref<1x2x18x4xbf16, #tpu.memory_space<vmem>>, vector<1x1x18x4xbf16>
    %5 = vector.shape_cast %4 : vector<1x1x18x4xbf16> to vector<1x18x4xbf16>
    %6 = tpu.concatenate %1, %3, %5 in 0 : vector<1x18x4xbf16>, vector<16x18x4xbf16>, vector<1x18x4xbf16> -> vector<18x18x4xbf16>
    %7 = vector.extract_strided_slice %6 {offsets = [0, 0, 0], sizes = [16, 16, 4], strides = [1, 1, 1]} : vector<18x18x4xbf16> to vector<16x16x4xbf16>
    %8 = vector.extract_strided_slice %6 {offsets = [0, 1, 0], sizes = [16, 16, 4], strides = [1, 1, 1]} : vector<18x18x4xbf16> to vector<16x16x4xbf16>
    %9 = vector.extract_strided_slice %6 {offsets = [0, 2, 0], sizes = [16, 16, 4], strides = [1, 1, 1]} : vector<18x18x4xbf16> to vector<16x16x4xbf16>
    %10 = vector.extract_strided_slice %6 {offsets = [1, 0, 0], sizes = [16, 16, 4], strides = [1, 1, 1]} : vector<18x18x4xbf16> to vector<16x16x4xbf16>
    %11 = vector.extract_strided_slice %6 {offsets = [1, 1, 0], sizes = [16, 16, 4], strides = [1, 1, 1]} : vector<18x18x4xbf16> to vector<16x16x4xbf16>
    %12 = vector.extract_strided_slice %6 {offsets = [1, 2, 0], sizes = [16, 16, 4], strides = [1, 1, 1]} : vector<18x18x4xbf16> to vector<16x16x4xbf16>
    %13 = vector.extract_strided_slice %6 {offsets = [2, 0, 0], sizes = [16, 16, 4], strides = [1, 1, 1]} : vector<18x18x4xbf16> to vector<16x16x4xbf16>
    %14 = vector.extract_strided_slice %6 {offsets = [2, 1, 0], sizes = [16, 16, 4], strides = [1, 1, 1]} : vector<18x18x4xbf16> to vector<16x16x4xbf16>
    %15 = vector.extract_strided_slice %6 {offsets = [2, 2, 0], sizes = [16, 16, 4], strides = [1, 1, 1]} : vector<18x18x4xbf16> to vector<16x16x4xbf16>
    %16 = tpu.concatenate %7, %8, %9, %10, %11, %12, %13, %14, %15 in 2 : vector<16x16x4xbf16>, vector<16x16x4xbf16>, vector<16x16x4xbf16>, vector<16x16x4xbf16>, vector<16x16x4xbf16>, vector<16x16x4xbf16>, vector<16x16x4xbf16>, vector<16x16x4xbf16>, vector<16x16x4xbf16> -> vector<16x16x36xbf16>
    %17 = vector.shape_cast %16 : vector<16x16x36xbf16> to vector<256x36xbf16>
    %cst = arith.constant 0.000000e+00 : bf16
    %18 = vector.broadcast %cst : bf16 to vector<256x92xbf16>
    %19 = tpu.concatenate %17, %18 in 1 : vector<256x36xbf16>, vector<256x92xbf16> -> vector<256x128xbf16>
    %c0_10 = arith.constant 0 : index
    %c0_11 = arith.constant 0 : index
    %20 = vector.load %arg3[%c0_10, %c0_11] : memref<128x128xbf16, #tpu.memory_space<vmem>>, vector<128x128xbf16>
    %cst_12 = arith.constant dense<0.000000e+00> : vector<256x128xf32>
    %21 = tpu.matmul %19, %20, %cst_12 {dimension_numbers = #tpu.dot_dimension_numbers<[1], [0], [0], [1], [0, 0, 1, 1], [], []>} : vector<256x128xbf16>, vector<128x128xbf16>, vector<256x128xf32> -> vector<256x128xf32>
    %c0_13 = arith.constant 0 : index
    %c0_14 = arith.constant 0 : index
    %22 = vector.load %arg4[%c0_13, %c0_14] : memref<1x128xf32, #tpu.memory_space<vmem>>, vector<1x128xf32>
    %23 = vector.broadcast %22 : vector<1x128xf32> to vector<256x128xf32>
    %24 = arith.addf %21, %23 : vector<256x128xf32>
    %25 = arith.truncf %24 : vector<256x128xf32> to vector<256x128xbf16>
    %c0_15 = arith.constant 0 : index
    %c0_16 = arith.constant 0 : index
    %c0_17 = arith.constant 0 : index
    %26 = vector.load %arg5[%c0_15, %c0_16, %c0_17] : memref<1x256x128xbf16, #tpu.memory_space<vmem>>, vector<1x256x128xbf16>
    %27 = vector.shape_cast %26 : vector<1x256x128xbf16> to vector<256x128xbf16>
    %28 = vector.shape_cast %25 : vector<256x128xbf16> to vector<1x256x128xbf16>
    tpu.vector_store %arg5[%c0_15, %c0_16, %c0_17], %28 {strides = array<i32>} : memref<1x256x128xbf16, #tpu.memory_space<vmem>>, vector<1x256x128xbf16>,
    %cst_18 = arith.constant dense<0.000000e+00> : vector<128xf32>
    %29 = vector.multi_reduction <add>, %24, %cst_18 [0] : vector<256x128xf32> to vector<128xf32>
    %30 = vector.shape_cast %29 : vector<128xf32> to vector<1x128xf32>
    %cst_19 = arith.constant 3.906250e-03 : f32
    %31 = vector.broadcast %cst_19 : f32 to vector<1x128xf32>
    %32 = arith.mulf %30, %31 : vector<1x128xf32>
    %33 = vector.broadcast %32 : vector<1x128xf32> to vector<256x128xf32>
    %34 = arith.subf %24, %33 : vector<256x128xf32>
    %c0_20 = arith.constant 0 : index
    %c0_21 = arith.constant 0 : index
    %c0_22 = arith.constant 0 : index
    %35 = vector.load %arg6[%c0_20, %c0_21, %c0_22] : memref<1x2x128xf32, #tpu.memory_space<vmem>>, vector<1x1x128xf32>
    %36 = vector.shape_cast %35 : vector<1x1x128xf32> to vector<1x128xf32>
    %37 = vector.shape_cast %30 : vector<1x128xf32> to vector<1x1x128xf32>
    tpu.vector_store %arg6[%c0_20, %c0_21, %c0_22], %37 {strides = array<i32>} : memref<1x2x128xf32, #tpu.memory_space<vmem>>, vector<1x1x128xf32>,
    %38 = arith.mulf %34, %34 : vector<256x128xf32>
    %cst_23 = arith.constant dense<0.000000e+00> : vector<128xf32>
    %39 = vector.multi_reduction <add>, %38, %cst_23 [0] : vector<256x128xf32> to vector<128xf32>
    %40 = vector.shape_cast %39 : vector<128xf32> to vector<1x128xf32>
    %c0_24 = arith.constant 0 : index
    %c1_25 = arith.constant 1 : index
    %c0_26 = arith.constant 0 : index
    %41 = vector.load %arg6[%c0_24, %c1_25, %c0_26] : memref<1x2x128xf32, #tpu.memory_space<vmem>>, vector<1x1x128xf32>
    %42 = vector.shape_cast %41 : vector<1x1x128xf32> to vector<1x128xf32>
    %43 = vector.shape_cast %40 : vector<1x128xf32> to vector<1x1x128xf32>
    tpu.vector_store %arg6[%c0_24, %c1_25, %c0_26], %43 {strides = array<i32>} : memref<1x2x128xf32, #tpu.memory_space<vmem>>, vector<1x1x128xf32>,
    return
  }
  func.func @transform_0(%arg0: i32) -> (i32, i32, i32, i32) {
    %c0_i32 = arith.constant 0 : i32
    %c0_i32_0 = arith.constant 0 : i32
    %c0_i32_1 = arith.constant 0 : i32
    %c0_i32_2 = arith.constant 0 : i32
    return %arg0, %c0_i32, %c0_i32_0, %c0_i32_1 : i32, i32, i32, i32
  }
  func.func @transform_1(%arg0: i32) -> (i32, i32, i32, i32) {
    %c0_i32 = arith.constant 0 : i32
    %c0_i32_0 = arith.constant 0 : i32
    %c0_i32_1 = arith.constant 0 : i32
    %c0_i32_2 = arith.constant 0 : i32
    return %arg0, %c0_i32, %c0_i32_0, %c0_i32_1 : i32, i32, i32, i32
  }
  func.func @transform_2(%arg0: i32) -> (i32, i32) {
    %c0_i32 = arith.constant 0 : i32
    %c0_i32_0 = arith.constant 0 : i32
    %c0_i32_1 = arith.constant 0 : i32
    return %c0_i32, %c0_i32_0 : i32, i32
  }
  func.func @transform_3(%arg0: i32) -> (i32, i32) {
    %c0_i32 = arith.constant 0 : i32
    %c0_i32_0 = arith.constant 0 : i32
    %c0_i32_1 = arith.constant 0 : i32
    return %c0_i32, %c0_i32_0 : i32, i32
  }
  func.func @transform_4(%arg0: i32) -> (i32, i32, i32) {
    %c0_i32 = arith.constant 0 : i32
    %c0_i32_0 = arith.constant 0 : i32
    %c0_i32_1 = arith.constant 0 : i32
    return %arg0, %c0_i32, %c0_i32_0 : i32, i32, i32
  }
  func.func @transform_5(%arg0: i32) -> (i32, i32, i32) {
    %c0_i32 = arith.constant 0 : i32
    %c0_i32_0 = arith.constant 0 : i32
    %c0_i32_1 = arith.constant 0 : i32
    return %arg0, %c0_i32, %c0_i32_0 : i32, i32, i32
  }
}

module attributes {stable_mosaic.version = 11 : i64} {
  func.func @_bn_relu_kernel(%arg0: i32, %arg1: memref<512x128xbf16, #tpu.memory_space<vmem>>, %arg2: memref<1x128xf32, #tpu.memory_space<vmem>>, %arg3: memref<1x128xf32, #tpu.memory_space<vmem>>, %arg4: memref<512x128xf32, #tpu.memory_space<vmem>>) attributes {dimension_semantics = [#tpu.dimension_semantics<parallel>], iteration_bounds = array<i64: 1>, scalar_prefetch = 0 : i64, scratch_operands = 0 : i64, tpu.core_type = #tpu.core_type<tc>, window_params = [{transform_indices = @transform_0, window_bounds = array<i64: 512, 128>}, {pipeline_mode = #tpu.pipeline_mode<synchronous>, transform_indices = @transform_1, window_bounds = array<i64: 1, 128>}, {pipeline_mode = #tpu.pipeline_mode<synchronous>, transform_indices = @transform_2, window_bounds = array<i64: 1, 128>}, {transform_indices = @transform_3, window_bounds = array<i64: 512, 128>}]} {
    %c0 = arith.constant 0 : index
    %c0_0 = arith.constant 0 : index
    %0 = vector.load %arg1[%c0, %c0_0] : memref<512x128xbf16, #tpu.memory_space<vmem>>, vector<512x128xbf16>
    %1 = arith.extf %0 : vector<512x128xbf16> to vector<512x128xf32>
    %c0_1 = arith.constant 0 : index
    %c0_2 = arith.constant 0 : index
    %2 = vector.load %arg2[%c0_1, %c0_2] : memref<1x128xf32, #tpu.memory_space<vmem>>, vector<1x128xf32>
    %3 = vector.broadcast %2 : vector<1x128xf32> to vector<512x128xf32>
    %4 = arith.mulf %1, %3 : vector<512x128xf32>
    %c0_3 = arith.constant 0 : index
    %c0_4 = arith.constant 0 : index
    %5 = vector.load %arg3[%c0_3, %c0_4] : memref<1x128xf32, #tpu.memory_space<vmem>>, vector<1x128xf32>
    %6 = vector.broadcast %5 : vector<1x128xf32> to vector<512x128xf32>
    %7 = arith.addf %4, %6 : vector<512x128xf32>
    %cst = arith.constant 0.000000e+00 : f32
    %8 = vector.broadcast %cst : f32 to vector<512x128xf32>
    %9 = arith.maximumf %7, %8 : vector<512x128xf32>
    %c0_5 = arith.constant 0 : index
    %c0_6 = arith.constant 0 : index
    %10 = vector.load %arg4[%c0_5, %c0_6] : memref<512x128xf32, #tpu.memory_space<vmem>>, vector<512x128xf32>
    tpu.vector_store %arg4[%c0_5, %c0_6], %9 {strides = array<i32>} : memref<512x128xf32, #tpu.memory_space<vmem>>, vector<512x128xf32>,
    return
  }
  func.func @transform_0(%arg0: i32) -> (i32, i32) {
    %c0_i32 = arith.constant 0 : i32
    %c0_i32_0 = arith.constant 0 : i32
    return %arg0, %c0_i32 : i32, i32
  }
  func.func @transform_1(%arg0: i32) -> (i32, i32) {
    %c0_i32 = arith.constant 0 : i32
    %c0_i32_0 = arith.constant 0 : i32
    %c0_i32_1 = arith.constant 0 : i32
    return %c0_i32, %c0_i32_0 : i32, i32
  }
  func.func @transform_2(%arg0: i32) -> (i32, i32) {
    %c0_i32 = arith.constant 0 : i32
    %c0_i32_0 = arith.constant 0 : i32
    %c0_i32_1 = arith.constant 0 : i32
    return %c0_i32, %c0_i32_0 : i32, i32
  }
  func.func @transform_3(%arg0: i32) -> (i32, i32) {
    %c0_i32 = arith.constant 0 : i32
    %c0_i32_0 = arith.constant 0 : i32
    return %arg0, %c0_i32 : i32, i32
  }
}

</mosaic_0001>

<llo_original>
// kernel: vgg_conv_transpose.3
$region0: #{vgg_conv_transpose.3}
  #allocation0 [shape = 'u32[]', space=smem, size = 0x4, offset = 0x4, fixed_abs, tag = 'smem constant byte address 0x4 - core index']
  #allocation1 [shape = 'u32[72,128]{1,0:T(1,128)}', space=vmem, size = 0x9000, scoped, tag = 'internal scratch']
  %s0 = inlined_call_operand.vmem [shape: bf16[512,128], index: 0, kind: input, shape index: {}]
  %s1 = inlined_call_operand.vmem [shape: f32[1,128], index: 1, kind: input, shape index: {}]
  %s2 = inlined_call_operand.vmem [shape: f32[1,128], index: 2, kind: input, shape index: {}]
  %s3 = inlined_call_operand.vmem [shape: f32[512,128], index: 3, kind: output, shape index: {}]
  %s4 = sld [smem:[#allocation0]]
  $region22: #{vgg_conv_transpose.3} parent=0
    _
  %s6 = ssub.s32 1, %s4
  %s7 = scalar_select 0, %s6, %s4
  // Predicated region
  $region2: #{vgg_conv_transpose.3} parent=0 // pred_check
    _
  $region3: #{vgg_conv_transpose.3} parent=0 // pred_check_branch
    %9 = sbr.rel (0) target = $region5
  $region4: #{vgg_conv_transpose.3} parent=0 // pred_region
    _
  $region5: #{vgg_conv_transpose.3} parent=0 // pred_fallthru
    _
  // Predicated region
  $region6: #{vgg_conv_transpose.3} parent=0 // pred_check
    _
  $region7: #{vgg_conv_transpose.3} parent=0 // pred_check_branch
    %11 = sbr.rel (0) target = $region9
  $region8: #{vgg_conv_transpose.3} parent=0 // pred_region
    _
  $region9: #{vgg_conv_transpose.3} parent=0 // pred_fallthru
    _
  // Predicated region
  $region10: #{vgg_conv_transpose.3} parent=0 // pred_check
    _
  $region11: #{vgg_conv_transpose.3} parent=0 // pred_check_branch
    %13 = sbr.rel (0) target = $region13
  $region12: #{vgg_conv_transpose.3} parent=0 // pred_region
    _
  $region13: #{vgg_conv_transpose.3} parent=0 // pred_fallthru
    _
  %v14 = vld [vmem:[%s0] sm:$0xf]
  %v15 = vld [vmem:[%s0 + $0x4] sm:$0xf]
  %v16 = vld [vmem:[%s0 + $0x8] sm:$0xf]
  %v17 = vld [vmem:[%s0 + $0xc] sm:$0xf]
  %v18 = vld [vmem:[%s0 + $0x10] sm:$0xf]
  %v19 = vld [vmem:[%s0 + $0x14] sm:$0xf]
  %v20 = vld [vmem:[%s0 + $0x18] sm:$0xf]
  %v21 = vld [vmem:[%s0 + $0x1c] sm:$0xf]
  %v22 = vld [vmem:[%s0 + $0x20] sm:$0xf]
  %v23 = vld [vmem:[%s0 + $0x24] sm:$0xf]
  %v24 = vld [vmem:[%s0 + $0x28] sm:$0xf]
  %v25 = vld [vmem:[%s0 + $0x2c] sm:$0xf]
  %v26 = vld [vmem:[%s0 + $0x30] sm:$0xf]
  %v27 = vld [vmem:[%s0 + $0x34] sm:$0xf]
  %v28 = vld [vmem:[%s0 + $0x38] sm:$0xf]
  %v29 = vld [vmem:[%s0 + $0x3c] sm:$0xf]
  %v30 = vld [vmem:[%s0 + $0x40] sm:$0xf]
  %v31 = vld [vmem:[%s0 + $0x44] sm:$0xf]
  %v32 = vld [vmem:[%s0 + $0x48] sm:$0xf]
  %v33 = vld [vmem:[%s0 + $0x4c] sm:$0xf]
  %v34 = vld [vmem:[%s0 + $0x50] sm:$0xf]
  %v35 = vld [vmem:[%s0 + $0x54] sm:$0xf]
  %v36 = vld [vmem:[%s0 + $0x58] sm:$0xf]
  %v37 = vld [vmem:[%s0 + $0x5c] sm:$0xf]
  %v38 = vld [vmem:[%s0 + $0x60] sm:$0xf]
  %v39 = vld [vmem:[%s0 + $0x64] sm:$0xf]
  %v40 = vld [vmem:[%s0 + $0x68] sm:$0xf]
  %v41 = vld [vmem:[%s0 + $0x6c] sm:$0xf]
  %v42 = vld [vmem:[%s0 + $0x70] sm:$0xf]
  %v43 = vld [vmem:[%s0 + $0x74] sm:$0xf]
  %v44 = vld [vmem:[%s0 + $0x78] sm:$0xf]
  %v45 = vld [vmem:[%s0 + $0x7c] sm:$0xf]
  %v46 = vld [vmem:[%s0 + $0x80] sm:$0xf]
  %v47 = vld [vmem:[%s0 + $0x84] sm:$0xf]
  %v48 = vld [vmem:[%s0 + $0x88] sm:$0xf]
  %v49 = vld [vmem:[%s0 + $0x8c] sm:$0xf]
  %v50 = vld [vmem:[%s0 + $0x90] sm:$0xf]
  %v51 = vld [vmem:[%s0 + $0x94] sm:$0xf]
  %v52 = vld [vmem:[%s0 + $0x98] sm:$0xf]
  %v53 = vld [vmem:[%s0 + $0x9c] sm:$0xf]
  %v54 = vld [vmem:[%s0 + $0xa0] sm:$0xf]
  %v55 = vld [vmem:[%s0 + $0xa4] sm:$0xf]
  %v56 = vld [vmem:[%s0 + $0xa8] sm:$0xf]
  %v57 = vld [vmem:[%s0 + $0xac] sm:$0xf]
  %v58 = vld [vmem:[%s0 + $0xb0] sm:$0xf]
  %v59 = vld [vmem:[%s0 + $0xb4] sm:$0xf]
  %v60 = vld [vmem:[%s0 + $0xb8] sm:$0xf]
  %v61 = vld [vmem:[%s0 + $0xbc] sm:$0xf]
  %v62 = vld [vmem:[%s0 + $0xc0] sm:$0xf]
  %v63 = vld [vmem:[%s0 + $0xc4] sm:$0xf]
  %v64 = vld [vmem:[%s0 + $0xc8] sm:$0xf]
  %v65 = vld [vmem:[%s0 + $0xcc] sm:$0xf]
  %v66 = vld [vmem:[%s0 + $0xd0] sm:$0xf]
  %v67 = vld [vmem:[%s0 + $0xd4] sm:$0xf]
  %v68 = vld [vmem:[%s0 + $0xd8] sm:$0xf]
  %v69 = vld [vmem:[%s0 + $0xdc] sm:$0xf]
  %v70 = vld [vmem:[%s0 + $0xe0] sm:$0xf]
  %v71 = vld [vmem:[%s0 + $0xe4] sm:$0xf]
  %v72 = vld [vmem:[%s0 + $0xe8] sm:$0xf]
  %v73 = vld [vmem:[%s0 + $0xec] sm:$0xf]
  %v74 = vld [vmem:[%s0 + $0xf0] sm:$0xf]
  %v75 = vld [vmem:[%s0 + $0xf4] sm:$0xf]
  %v76 = vld [vmem:[%s0 + $0xf8] sm:$0xf]
  %v77 = vld [vmem:[%s0 + $0xfc] sm:$0xf]
  %v78 = vunpack.c.l.bf16 %v14
  %v79 = vunpack.c.l.bf16 %v15
  %v80 = vunpack.c.l.bf16 %v16
  %v81 = vunpack.c.l.bf16 %v17
  %v82 = vunpack.c.l.bf16 %v18
  %v83 = vunpack.c.l.bf16 %v19
  %v84 = vunpack.c.l.bf16 %v20
  %v85 = vunpack.c.l.bf16 %v21
  %v86 = vunpack.c.l.bf16 %v22
  %v87 = vunpack.c.l.bf16 %v23
  %v88 = vunpack.c.l.bf16 %v24
  %v89 = vunpack.c.l.bf16 %v25
  %v90 = vunpack.c.l.bf16 %v26
  %v91 = vunpack.c.l.bf16 %v27
  %v92 = vunpack.c.l.bf16 %v28
  %v93 = vunpack.c.l.bf16 %v29
  %v94 = vunpack.c.l.bf16 %v30
  %v95 = vunpack.c.l.bf16 %v31
  %v96 = vunpack.c.l.bf16 %v32
  %v97 = vunpack.c.l.bf16 %v33
  %v98 = vunpack.c.l.bf16 %v34
  %v99 = vunpack.c.l.bf16 %v35
  %v100 = vunpack.c.l.bf16 %v36
  %v101 = vunpack.c.l.bf16 %v37
  %v102 = vunpack.c.l.bf16 %v38
  %v103 = vunpack.c.l.bf16 %v39
  %v104 = vunpack.c.l.bf16 %v40
  %v105 = vunpack.c.l.bf16 %v41
  %v106 = vunpack.c.l.bf16 %v42
  %v107 = vunpack.c.l.bf16 %v43
  %v108 = vunpack.c.l.bf16 %v44
  %v109 = vunpack.c.l.bf16 %v45
  %v110 = vunpack.c.l.bf16 %v46
  %v111 = vunpack.c.l.bf16 %v47
  %v112 = vunpack.c.l.bf16 %v48
  %v113 = vunpack.c.l.bf16 %v49
  %v114 = vunpack.c.l.bf16 %v50
  %v115 = vunpack.c.l.bf16 %v51
  %v116 = vunpack.c.l.bf16 %v52
  %v117 = vunpack.c.l.bf16 %v53
  %v118 = vunpack.c.l.bf16 %v54
  %v119 = vunpack.c.l.bf16 %v55
  %v120 = vunpack.c.l.bf16 %v56
  %v121 = vunpack.c.l.bf16 %v57
  %v122 = vunpack.c.l.bf16 %v58
  %v123 = vunpack.c.l.bf16 %v59
  %v124 = vunpack.c.l.bf16 %v60
  %v125 = vunpack.c.l.bf16 %v61
  %v126 = vunpack.c.l.bf16 %v62
  %v127 = vunpack.c.l.bf16 %v63
  %v128 = vunpack.c.l.bf16 %v64
  %v129 = vunpack.c.l.bf16 %v65
  %v130 = vunpack.c.l.bf16 %v66
  %v131 = vunpack.c.l.bf16 %v67
  %v132 = vunpack.c.l.bf16 %v68
  %v133 = vunpack.c.l.bf16 %v69
  %v134 = vunpack.c.l.bf16 %v70
  %v135 = vunpack.c.l.bf16 %v71
  %v136 = vunpack.c.l.bf16 %v72
  %v137 = vunpack.c.l.bf16 %v73
  %v138 = vunpack.c.l.bf16 %v74
  %v139 = vunpack.c.l.bf16 %v75
  %v140 = vunpack.c.l.bf16 %v76
  %v141 = vunpack.c.l.bf16 %v77
  %v142 = vld [vmem:[%s1] sm:$0x1]
  %v144 = vperm.slane %v142, 0
  %v146 = vmul.f32 %v78, %v144
  %v147 = vmul.f32 %v79, %v144
  %v148 = vmul.f32 %v80, %v144
  %v149 = vmul.f32 %v81, %v144
  %v150 = vmul.f32 %v82, %v144
  %v151 = vmul.f32 %v83, %v144
  %v152 = vmul.f32 %v84, %v144
  %v153 = vmul.f32 %v85, %v144
  %v154 = vmul.f32 %v86, %v144
  %v155 = vmul.f32 %v87, %v144
  %v156 = vmul.f32 %v88, %v144
  %v157 = vmul.f32 %v89, %v144
  %v158 = vmul.f32 %v90, %v144
  %v159 = vmul.f32 %v91, %v144
  %v160 = vmul.f32 %v92, %v144
  %v161 = vmul.f32 %v93, %v144
  %v162 = vmul.f32 %v94, %v144
  %v163 = vmul.f32 %v95, %v144
  %v164 = vmul.f32 %v96, %v144
  %v165 = vmul.f32 %v97, %v144
  %v166 = vmul.f32 %v98, %v144
  %v167 = vmul.f32 %v99, %v144
  %v168 = vmul.f32 %v100, %v144
  %v169 = vmul.f32 %v101, %v144
  %v170 = vmul.f32 %v102, %v144
  %v171 = vmul.f32 %v103, %v144
  %v172 = vmul.f32 %v104, %v144
  %v173 = vmul.f32 %v105, %v144
  %v174 = vmul.f32 %v106, %v144
  %v175 = vmul.f32 %v107, %v144
  %v176 = vmul.f32 %v108, %v144
  %v177 = vmul.f32 %v109, %v144
  %v178 = vmul.f32 %v110, %v144
  %v179 = vmul.f32 %v111, %v144
  %v180 = vmul.f32 %v112, %v144
  %v181 = vmul.f32 %v113, %v144
  %v182 = vmul.f32 %v114, %v144
  %v183 = vmul.f32 %v115, %v144
  %v184 = vmul.f32 %v116, %v144
  %v185 = vmul.f32 %v117, %v144
  %v186 = vmul.f32 %v118, %v144
  %v187 = vmul.f32 %v119, %v144
  %v188 = vmul.f32 %v120, %v144
  %v189 = vmul.f32 %v121, %v144
  %v190 = vmul.f32 %v122, %v144
  %v191 = vmul.f32 %v123, %v144
  %v192 = vmul.f32 %v124, %v144
  %v193 = vmul.f32 %v125, %v144
  %v194 = vmul.f32 %v126, %v144
  %v195 = vmul.f32 %v127, %v144
  %v196 = vmul.f32 %v128, %v144
  %v197 = vmul.f32 %v129, %v144
  %v198 = vmul.f32 %v130, %v144
  %v199 = vmul.f32 %v131, %v144
  %v200 = vmul.f32 %v132, %v144
  %v201 = vmul.f32 %v133, %v144
  %v202 = vmul.f32 %v134, %v144
  %v203 = vmul.f32 %v135, %v144
  %v204 = vmul.f32 %v136, %v144
  %v205 = vmul.f32 %v137, %v144
  %v206 = vmul.f32 %v138, %v144
  %v207 = vmul.f32 %v139, %v144
  %v208 = vmul.f32 %v140, %v144
  %v209 = vmul.f32 %v141, %v144
  %v210 = vld [vmem:[%s2] sm:$0x1]
  %v212 = vperm.slane %v210, 0
  %v214 = vadd.f32 %v146, %v212
  %v215 = vadd.f32 %v147, %v212
  %v216 = vadd.f32 %v148, %v212
  %v217 = vadd.f32 %v149, %v212
  %v218 = vadd.f32 %v150, %v212
  %v219 = vadd.f32 %v151, %v212
  %v220 = vadd.f32 %v152, %v212
  %v221 = vadd.f32 %v153, %v212
  %v222 = vadd.f32 %v154, %v212
  %v223 = vadd.f32 %v155, %v212
  %v224 = vadd.f32 %v156, %v212
  %v225 = vadd.f32 %v157, %v212
  %v226 = vadd.f32 %v158, %v212
  %v227 = vadd.f32 %v159, %v212
  %v228 = vadd.f32 %v160, %v212
  %v229 = vadd.f32 %v161, %v212
  %v230 = vadd.f32 %v162, %v212
  %v231 = vadd.f32 %v163, %v212
  %v232 = vadd.f32 %v164, %v212
  %v233 = vadd.f32 %v165, %v212
  %v234 = vadd.f32 %v166, %v212
  %v235 = vadd.f32 %v167, %v212
  %v236 = vadd.f32 %v168, %v212
  %v237 = vadd.f32 %v169, %v212
  %v238 = vadd.f32 %v170, %v212
  %v239 = vadd.f32 %v171, %v212
  %v240 = vadd.f32 %v172, %v212
  %v241 = vadd.f32 %v173, %v212
  %v242 = vadd.f32 %v174, %v212
  %v243 = vadd.f32 %v175, %v212
  %v244 = vadd.f32 %v176, %v212
  %v245 = vadd.f32 %v177, %v212
  %v246 = vadd.f32 %v178, %v212
  %v247 = vadd.f32 %v179, %v212
  %v248 = vadd.f32 %v180, %v212
  %v249 = vadd.f32 %v181, %v212
  %v250 = vadd.f32 %v182, %v212
  %v251 = vadd.f32 %v183, %v212
  %v252 = vadd.f32 %v184, %v212
  %v253 = vadd.f32 %v185, %v212
  %v254 = vadd.f32 %v186, %v212
  %v255 = vadd.f32 %v187, %v212
  %v256 = vadd.f32 %v188, %v212
  %v257 = vadd.f32 %v189, %v212
  %v258 = vadd.f32 %v190, %v212
  %v259 = vadd.f32 %v191, %v212
  %v260 = vadd.f32 %v192, %v212
  %v261 = vadd.f32 %v193, %v212
  %v262 = vadd.f32 %v194, %v212
  %v263 = vadd.f32 %v195, %v212
  %v264 = vadd.f32 %v196, %v212
  %v265 = vadd.f32 %v197, %v212
  %v266 = vadd.f32 %v198, %v212
  %v267 = vadd.f32 %v199, %v212
  %v268 = vadd.f32 %v200, %v212
  %v269 = vadd.f32 %v201, %v212
  %v270 = vadd.f32 %v202, %v212
  %v271 = vadd.f32 %v203, %v212
  %v272 = vadd.f32 %v204, %v212
  %v273 = vadd.f32 %v205, %v212
  %v274 = vadd.f32 %v206, %v212
  %v275 = vadd.f32 %v207, %v212
  %v276 = vadd.f32 %v208, %v212
  %v277 = vadd.f32 %v209, %v212
  %v278 = vmax.f32 %v214, 0.0
  %v279 = vmax.f32 %v215, 0.0
  %v280 = vmax.f32 %v216, 0.0
  %v281 = vmax.f32 %v217, 0.0
  %v282 = vmax.f32 %v218, 0.0
  %v283 = vmax.f32 %v219, 0.0
  %v284 = vmax.f32 %v220, 0.0
  %v285 = vmax.f32 %v221, 0.0
  %v286 = vmax.f32 %v222, 0.0
  %v287 = vmax.f32 %v223, 0.0
  %v288 = vmax.f32 %v224, 0.0
  %v289 = vmax.f32 %v225, 0.0
  %v290 = vmax.f32 %v226, 0.0
  %v291 = vmax.f32 %v227, 0.0
  %v292 = vmax.f32 %v228, 0.0
  %v293 = vmax.f32 %v229, 0.0
  %v294 = vmax.f32 %v230, 0.0
  %v295 = vmax.f32 %v231, 0.0
  %v296 = vmax.f32 %v232, 0.0
  %v297 = vmax.f32 %v233, 0.0
  %v298 = vmax.f32 %v234, 0.0
  %v299 = vmax.f32 %v235, 0.0
  %v300 = vmax.f32 %v236, 0.0
  %v301 = vmax.f32 %v237, 0.0
  %v302 = vmax.f32 %v238, 0.0
  %v303 = vmax.f32 %v239, 0.0
  %v304 = vmax.f32 %v240, 0.0
  %v305 = vmax.f32 %v241, 0.0
  %v306 = vmax.f32 %v242, 0.0
  %v307 = vmax.f32 %v243, 0.0
  %v308 = vmax.f32 %v244, 0.0
  %v309 = vmax.f32 %v245, 0.0
  %v310 = vmax.f32 %v246, 0.0
  %v311 = vmax.f32 %v247, 0.0
  %v312 = vmax.f32 %v248, 0.0
  %v313 = vmax.f32 %v249, 0.0
  %v314 = vmax.f32 %v250, 0.0
  %v315 = vmax.f32 %v251, 0.0
  %v316 = vmax.f32 %v252, 0.0
  %v317 = vmax.f32 %v253, 0.0
  %v318 = vmax.f32 %v254, 0.0
  %v319 = vmax.f32 %v255, 0.0
  %v320 = vmax.f32 %v256, 0.0
  %v321 = vmax.f32 %v257, 0.0
  %v322 = vmax.f32 %v258, 0.0
  %v323 = vmax.f32 %v259, 0.0
  %v324 = vmax.f32 %v260, 0.0
  %v325 = vmax.f32 %v261, 0.0
  %v326 = vmax.f32 %v262, 0.0
  %v327 = vmax.f32 %v263, 0.0
  %v328 = vmax.f32 %v264, 0.0
  %v329 = vmax.f32 %v265, 0.0
  %v330 = vmax.f32 %v266, 0.0
  %v331 = vmax.f32 %v267, 0.0
  %v332 = vmax.f32 %v268, 0.0
  %v333 = vmax.f32 %v269, 0.0
  %v334 = vmax.f32 %v270, 0.0
  %v335 = vmax.f32 %v271, 0.0
  %v336 = vmax.f32 %v272, 0.0
  %v337 = vmax.f32 %v273, 0.0
  %v338 = vmax.f32 %v274, 0.0
  %v339 = vmax.f32 %v275, 0.0
  %v340 = vmax.f32 %v276, 0.0
  %v341 = vmax.f32 %v277, 0.0
  %342 = vst [vmem:[%s3] sm:$0xff] %v278
  %343 = vst [vmem:[%s3 + $0x8] sm:$0xff] %v279
  %344 = vst [vmem:[%s3 + $0x10] sm:$0xff] %v280
  %345 = vst [vmem:[%s3 + $0x18] sm:$0xff] %v281
  %346 = vst [vmem:[%s3 + $0x20] sm:$0xff] %v282
  %347 = vst [vmem:[%s3 + $0x28] sm:$0xff] %v283
  %348 = vst [vmem:[%s3 + $0x30] sm:$0xff] %v284
  %349 = vst [vmem:[%s3 + $0x38] sm:$0xff] %v285
  %350 = vst [vmem:[%s3 + $0x40] sm:$0xff] %v286
  %351 = vst [vmem:[%s3 + $0x48] sm:$0xff] %v287
  %352 = vst [vmem:[%s3 + $0x50] sm:$0xff] %v288
  %353 = vst [vmem:[%s3 + $0x58] sm:$0xff] %v289
  %354 = vst [vmem:[%s3 + $0x60] sm:$0xff] %v290
  %355 = vst [vmem:[%s3 + $0x68] sm:$0xff] %v291
  %356 = vst [vmem:[%s3 + $0x70] sm:$0xff] %v292
  %357 = vst [vmem:[%s3 + $0x78] sm:$0xff] %v293
  %358 = vst [vmem:[%s3 + $0x80] sm:$0xff] %v294
  %359 = vst [vmem:[%s3 + $0x88] sm:$0xff] %v295
  %360 = vst [vmem:[%s3 + $0x90] sm:$0xff] %v296
  %361 = vst [vmem:[%s3 + $0x98] sm:$0xff] %v297
  %362 = vst [vmem:[%s3 + $0xa0] sm:$0xff] %v298
  %363 = vst [vmem:[%s3 + $0xa8] sm:$0xff] %v299
  %364 = vst [vmem:[%s3 + $0xb0] sm:$0xff] %v300
  %365 = vst [vmem:[%s3 + $0xb8] sm:$0xff] %v301
  %366 = vst [vmem:[%s3 + $0xc0] sm:$0xff] %v302
  %367 = vst [vmem:[%s3 + $0xc8] sm:$0xff] %v303
  %368 = vst [vmem:[%s3 + $0xd0] sm:$0xff] %v304
  %369 = vst [vmem:[%s3 + $0xd8] sm:$0xff] %v305
  %370 = vst [vmem:[%s3 + $0xe0] sm:$0xff] %v306
  %371 = vst [vmem:[%s3 + $0xe8] sm:$0xff] %v307
  %372 = vst [vmem:[%s3 + $0xf0] sm:$0xff] %v308
  %373 = vst [vmem:[%s3 + $0xf8] sm:$0xff] %v309
  %374 = vst [vmem:[%s3 + $0x100] sm:$0xff] %v310
  %375 = vst [vmem:[%s3 + $0x108] sm:$0xff] %v311
  %376 = vst [vmem:[%s3 + $0x110] sm:$0xff] %v312
  %377 = vst [vmem:[%s3 + $0x118] sm:$0xff] %v313
  %378 = vst [vmem:[%s3 + $0x120] sm:$0xff] %v314
  %379 = vst [vmem:[%s3 + $0x128] sm:$0xff] %v315
  %380 = vst [vmem:[%s3 + $0x130] sm:$0xff] %v316
  %381 = vst [vmem:[%s3 + $0x138] sm:$0xff] %v317
  %382 = vst [vmem:[%s3 + $0x140] sm:$0xff] %v318
  %383 = vst [vmem:[%s3 + $0x148] sm:$0xff] %v319
  %384 = vst [vmem:[%s3 + $0x150] sm:$0xff] %v320
  %385 = vst [vmem:[%s3 + $0x158] sm:$0xff] %v321
  %386 = vst [vmem:[%s3 + $0x160] sm:$0xff] %v322
  %387 = vst [vmem:[%s3 + $0x168] sm:$0xff] %v323
  %388 = vst [vmem:[%s3 + $0x170] sm:$0xff] %v324
  %389 = vst [vmem:[%s3 + $0x178] sm:$0xff] %v325
  %390 = vst [vmem:[%s3 + $0x180] sm:$0xff] %v326
  %391 = vst [vmem:[%s3 + $0x188] sm:$0xff] %v327
  %392 = vst [vmem:[%s3 + $0x190] sm:$0xff] %v328
  %393 = vst [vmem:[%s3 + $0x198] sm:$0xff] %v329
  %394 = vst [vmem:[%s3 + $0x1a0] sm:$0xff] %v330
  %395 = vst [vmem:[%s3 + $0x1a8] sm:$0xff] %v331
  %396 = vst [vmem:[%s3 + $0x1b0] sm:$0xff] %v332
  %397 = vst [vmem:[%s3 + $0x1b8] sm:$0xff] %v333
  %398 = vst [vmem:[%s3 + $0x1c0] sm:$0xff] %v334
  %399 = vst [vmem:[%s3 + $0x1c8] sm:$0xff] %v335
  %400 = vst [vmem:[%s3 + $0x1d0] sm:$0xff] %v336
  %401 = vst [vmem:[%s3 + $0x1d8] sm:$0xff] %v337
  %402 = vst [vmem:[%s3 + $0x1e0] sm:$0xff] %v338
  %403 = vst [vmem:[%s3 + $0x1e8] sm:$0xff] %v339
  %404 = vst [vmem:[%s3 + $0x1f0] sm:$0xff] %v340
  %405 = vst [vmem:[%s3 + $0x1f8] sm:$0xff] %v341
  // Predicated region
  $region14: #{vgg_conv_transpose.3} parent=0 // pred_check
    _
  $region15: #{vgg_conv_transpose.3} parent=0 // pred_check_branch
    %407 = sbr.rel (0) target = $region17
  $region16: #{vgg_conv_transpose.3} parent=0 // pred_region
    _
  $region17: #{vgg_conv_transpose.3} parent=0 // pred_fallthru
    _
  // Predicated region
  $region18: #{vgg_conv_transpose.3} parent=0 // pred_check
    _
  $region19: #{vgg_conv_transpose.3} parent=0 // pred_check_branch
    %409 = sbr.rel (0) target = $region21
  $region20: #{vgg_conv_transpose.3} parent=0 // pred_region
    _
  $region21: #{vgg_conv_transpose.3} parent=0 // pred_fallthru
    _

// kernel: vgg_conv_transpose.2
$region0: #{vgg_conv_transpose.2}
  #allocation0 [shape = 'u32[]', space=smem, size = 0x4, offset = 0x4, fixed_abs, tag = 'smem constant byte address 0x4 - core index']
  #allocation1 [shape = 'u32[72,128]{1,0:T(1,128)}', space=vmem, size = 0x9000, scoped, tag = 'internal scratch']
  %s0 = inlined_call_operand.vmem [shape: bf16[2,16,18,4], index: 0, kind: input, shape index: {}]
  %s1 = inlined_call_operand.vmem [shape: bf16[2,2,18,4], index: 1, kind: input, shape index: {}]
  %s2 = inlined_call_operand.vmem [shape: bf16[128,128], index: 2, kind: input, shape index: {}]
  %s3 = inlined_call_operand.vmem [shape: f32[1,128], index: 3, kind: input, shape index: {}]
  %s4 = inlined_call_operand.vmem [shape: bf16[2,256,128], index: 4, kind: output, shape index: {0}]
  %s5 = inlined_call_operand.vmem [shape: f32[2,2,128], index: 5, kind: output, shape index: {1}]
  %6 = xla_tuple %s4, %s5
  %s7 = sld [smem:[#allocation0]]
  $region57: #{vgg_conv_transpose.2} parent=0
    _
  %s9 = ssub.s32 1, %s7
  %s10 = scalar_select 0, %s9, %s7
  loop: start=0, step=1, limit=4
  $region2: #{vgg_conv_transpose.2} parent=0 // loop_pre_header
    _
  $region3: #{vgg_conv_transpose.2} parent=0 // loop_header
    %s12 = sphi 0, %s16
    %p13 = scmp.ge.s32.totalorder %s12, 4
    %s22 = sphi 0, %s24
    %s25 = sphi 0, %s22
    %s26 = sphi 0, %s25
    %s42 = sphi 0, %s26
    %s48 = sphi 0, %s50
    %s51 = sphi 0, %s48
    %s52 = sphi 0, %s51
    %s68 = sphi 0, %s52
    %s72 = sphi 0, %s72
    %s74 = sphi 0, %s72
    %s75 = sphi 0, %s74
    %s89 = sphi 0, %s75
    %s93 = sphi 0, %s93
    %s95 = sphi 0, %s93
    %s96 = sphi 0, %s95
    %s110 = sphi 0, %s96
    %s116 = sphi 0, %s118
    %s119 = sphi 0, %s116
    %s120 = sphi 0, %s119
    %s136 = sphi 0, %s120
    %s142 = sphi 0, %s144
    %s145 = sphi 0, %s142
    %s146 = sphi 0, %s145
    %s162 = sphi 0, %s146
  $region4: #{vgg_conv_transpose.2} parent=0 // loop_header_branch
    %15 = sbr.rel (%p13) target = $region8
  $region5: #{vgg_conv_transpose.2} parent=0 // loop_body
    %s17 = ssub.s32 %s12, 1
    %s18 = ssub.s32 %s12, 2
    %s19 = sadd.s32 %s12, 1
    %s20 = ssub.s32 %s12, %s19
    %p21 = scmp.eq.s32.totalorder %s20, 0
    %s23 = sadd.s32 %s22, 1
    %s24 = scalar_select %p21, %s22, %s23
    %p27 = pneg %p21
    %p28 = scmp.eq.s32.totalorder %s12, 1
    %p29 = por %p27, %p28
    %p30 = scmp.ne.s32.totalorder %s22, %s25
    %p31 = scmp.eq.s32.totalorder %s12, 0
    %p32 = por %p30, %p31
    %p33 = scmp.ne.s32.totalorder %s22, %s25
    %p34 = scmp.eq.s32.totalorder %s17, 1
    %p35 = por %p33, %p34
    %p36 = scmp.ne.s32.totalorder %s25, %s26
    %p37 = scmp.eq.s32.totalorder %s17, 0
    %p38 = por %p36, %p37
    %p39 = scmp.ne.s32.totalorder %s25, %s26
    %p40 = scmp.eq.s32.totalorder %s18, 1
    %p41 = por %p39, %p40
    %p43 = scmp.ne.s32.totalorder %s26, %s42
    %p44 = scmp.eq.s32.totalorder %s18, 0
    %p45 = por %p43, %p44
    %s46 = ssub.s32 %s12, %s19
    %p47 = scmp.eq.s32.totalorder %s46, 0
    %s49 = sadd.s32 %s48, 1
    %s50 = scalar_select %p47, %s48, %s49
    %p53 = pneg %p47
    %p54 = scmp.eq.s32.totalorder %s12, 1
    %p55 = por %p53, %p54
    %p56 = scmp.ne.s32.totalorder %s48, %s51
    %p57 = scmp.eq.s32.totalorder %s12, 0
    %p58 = por %p56, %p57
    %p59 = scmp.ne.s32.totalorder %s48, %s51
    %p60 = scmp.eq.s32.totalorder %s17, 1
    %p61 = por %p59, %p60
    %p62 = scmp.ne.s32.totalorder %s51, %s52
    %p63 = scmp.eq.s32.totalorder %s17, 0
    %p64 = por %p62, %p63
    %p65 = scmp.ne.s32.totalorder %s51, %s52
    %p66 = scmp.eq.s32.totalorder %s18, 1
    %p67 = por %p65, %p66
    %p69 = scmp.ne.s32.totalorder %s52, %s68
    %p70 = scmp.eq.s32.totalorder %s18, 0
    %p71 = por %p69, %p70
    %s73 = sadd.s32 %s72, 1
    %p76 = scmp.eq.s32.totalorder %s12, 1
    %p77 = scmp.ne.s32.totalorder %s72, %s74
    %p78 = scmp.eq.s32.totalorder %s12, 0
    %p79 = por %p77, %p78
    %p80 = scmp.ne.s32.totalorder %s72, %s74
    %p81 = scmp.eq.s32.totalorder %s17, 1
    %p82 = por %p80, %p81
    %p83 = scmp.ne.s32.totalorder %s74, %s75
    %p84 = scmp.eq.s32.totalorder %s17, 0
    %p85 = por %p83, %p84
    %p86 = scmp.ne.s32.totalorder %s74, %s75
    %p87 = scmp.eq.s32.totalorder %s18, 1
    %p88 = por %p86, %p87
    %p90 = scmp.ne.s32.totalorder %s75, %s89
    %p91 = scmp.eq.s32.totalorder %s18, 0
    %p92 = por %p90, %p91
    %s94 = sadd.s32 %s93, 1
    %p97 = scmp.eq.s32.totalorder %s12, 1
    %p98 = scmp.ne.s32.totalorder %s93, %s95
    %p99 = scmp.eq.s32.totalorder %s12, 0
    %p100 = por %p98, %p99
    %p101 = scmp.ne.s32.totalorder %s93, %s95
    %p102 = scmp.eq.s32.totalorder %s17, 1
    %p103 = por %p101, %p102
    %p104 = scmp.ne.s32.totalorder %s95, %s96
    %p105 = scmp.eq.s32.totalorder %s17, 0
    %p106 = por %p104, %p105
    %p107 = scmp.ne.s32.totalorder %s95, %s96
    %p108 = scmp.eq.s32.totalorder %s18, 1
    %p109 = por %p107, %p108
    %p111 = scmp.ne.s32.totalorder %s96, %s110
    %p112 = scmp.eq.s32.totalorder %s18, 0
    %p113 = por %p111, %p112
    %s114 = ssub.s32 %s12, %s19
    %p115 = scmp.eq.s32.totalorder %s114, 0
    %s117 = sadd.s32 %s116, 1
    %s118 = scalar_select %p115, %s116, %s117
    %p121 = pneg %p115
    %p122 = scmp.eq.s32.totalorder %s12, 1
    %p123 = por %p121, %p122
    %p124 = scmp.ne.s32.totalorder %s116, %s119
    %p125 = scmp.eq.s32.totalorder %s12, 0
    %p126 = por %p124, %p125
    %p127 = scmp.ne.s32.totalorder %s116, %s119
    %p128 = scmp.eq.s32.totalorder %s17, 1
    %p129 = por %p127, %p128
    %p130 = scmp.ne.s32.totalorder %s119, %s120
    %p131 = scmp.eq.s32.totalorder %s17, 0
    %p132 = por %p130, %p131
    %p133 = scmp.ne.s32.totalorder %s119, %s120
    %p134 = scmp.eq.s32.totalorder %s18, 1
    %p135 = por %p133, %p134
    %p137 = scmp.ne.s32.totalorder %s120, %s136
    %p138 = scmp.eq.s32.totalorder %s18, 0
    %p139 = por %p137, %p138
    %s140 = ssub.s32 %s12, %s19
    %p141 = scmp.eq.s32.totalorder %s140, 0
    %s143 = sadd.s32 %s142, 1
    %s144 = scalar_select %p141, %s142, %s143
    %p147 = pneg %p141
    %p148 = scmp.eq.s32.totalorder %s12, 1
    %p149 = por %p147, %p148
    %p150 = scmp.ne.s32.totalorder %s142, %s145
    %p151 = scmp.eq.s32.totalorder %s12, 0
    %p152 = por %p150, %p151
    %p153 = scmp.ne.s32.totalorder %s142, %s145
    %p154 = scmp.eq.s32.totalorder %s17, 1
    %p155 = por %p153, %p154
    %p156 = scmp.ne.s32.totalorder %s145, %s146
    %p157 = scmp.eq.s32.totalorder %s17, 0
    %p158 = por %p156, %p157
    %p159 = scmp.ne.s32.totalorder %s145, %s146
    %p160 = scmp.eq.s32.totalorder %s18, 1
    %p161 = por %p159, %p160
    %p163 = scmp.ne.s32.totalorder %s146, %s162
    %p164 = scmp.eq.s32.totalorder %s18, 0
    %p165 = por %p163, %p164
    %p166 = scmp.le.s32.totalorder 1, %s12
    %p167 = scmp.lt.s32.totalorder %s12, 3
    %p168 = pnand %p166, %p167
    %p169 = pneg %p168
    // Predicated region
    $region9: #{vgg_conv_transpose.2} parent=5 // pred_check
      _
    $region10: #{vgg_conv_transpose.2} parent=5 // pred_check_branch
      %171 = sbr.rel (%p168) target = $region12
    $region11: #{vgg_conv_transpose.2} parent=5 // pred_region
      %s172 = ssub.s32 %s12, 1
      // Predicated region
      $region13: #{vgg_conv_transpose.2} parent=11 // pred_check
        %p173 = pneg %p85
      $region14: #{vgg_conv_transpose.2} parent=11 // pred_check_branch
        %175 = sbr.rel (%p173) target = $region16
      $region15: #{vgg_conv_transpose.2} parent=11 // pred_region
        _
      $region16: #{vgg_conv_transpose.2} parent=11 // pred_fallthru
        _
      // Predicated region
      $region17: #{vgg_conv_transpose.2} parent=11 // pred_check
        %p176 = pneg %p106
      $region18: #{vgg_conv_transpose.2} parent=11 // pred_check_branch
        %178 = sbr.rel (%p176) target = $region20
      $region19: #{vgg_conv_transpose.2} parent=11 // pred_region
        _
      $region20: #{vgg_conv_transpose.2} parent=11 // pred_fallthru
        _
    $region12: #{vgg_conv_transpose.2} parent=5 // pred_fallthru
      _
    %p179 = scmp.lt.s32.totalorder %s12, 2
    // Predicated region
    $region21: #{vgg_conv_transpose.2} parent=5 // pred_check
      %p180 = pneg %p179
    $region22: #{vgg_conv_transpose.2} parent=5 // pred_check_branch
      %182 = sbr.rel (%p180) target = $region24
    $region23: #{vgg_conv_transpose.2} parent=5 // pred_region
      // Predicated region
      $region25: #{vgg_conv_transpose.2} parent=23 // pred_check
        %p183 = pneg %p32
      $region26: #{vgg_conv_transpose.2} parent=23 // pred_check_branch
        %185 = sbr.rel (%p183) target = $region28
      $region27: #{vgg_conv_transpose.2} parent=23 // pred_region
        %p186 = scmp.lt.s32.totalorder %s12, 1
        %s187 = scalar_select %p186, %s12, 1
        %s188 = smul.addr %s187, 48
        %s189 = smul.addr %s188, 4
        %s190 = scalar_lea.vmem %s0, %s189
      $region28: #{vgg_conv_transpose.2} parent=23 // pred_fallthru
        _
      // Predicated region
      $region29: #{vgg_conv_transpose.2} parent=23 // pred_check
        %p191 = pneg %p58
      $region30: #{vgg_conv_transpose.2} parent=23 // pred_check_branch
        %193 = sbr.rel (%p191) target = $region32
      $region31: #{vgg_conv_transpose.2} parent=23 // pred_region
        %p194 = scmp.lt.s32.totalorder %s12, 1
        %s195 = scalar_select %p194, %s12, 1
        %s196 = smul.addr %s195, 6
        %s197 = smul.addr %s196, 4
        %s198 = scalar_lea.vmem %s1, %s197
      $region32: #{vgg_conv_transpose.2} parent=23 // pred_fallthru
        _
    $region24: #{vgg_conv_transpose.2} parent=5 // pred_fallthru
      _
    %p199 = scmp.le.s32.totalorder 1, %s12
    %p200 = scmp.lt.s32.totalorder %s12, 3
    %p201 = pnand %p199, %p200
    %p202 = pneg %p201
    // Predicated region
    $region33: #{vgg_conv_transpose.2} parent=5 // pred_check
      _
    $region34: #{vgg_conv_transpose.2} parent=5 // pred_check_branch
      %204 = sbr.rel (%p201) target = $region36
    $region35: #{vgg_conv_transpose.2} parent=5 // pred_region
      %s205 = ssub.s32 %s12, 1
      %p206 = scmp.lt.s32.totalorder %s17, 1
      %s207 = scalar_select %p206, %s17, 1
      %s208 = smul.addr %s207, 48
      %s209 = smul.addr %s208, 4
      %s210 = scalar_lea.vmem %s0, %s209
      %p211 = pneg %p38
      %p212 = pneg %p35
      %p213 = scmp.lt.s32.totalorder %s17, 1
      %s214 = scalar_select %p213, %s17, 1
      %s215 = smul.addr %s214, 6
      %s216 = smul.addr %s215, 4
      %s217 = scalar_lea.vmem %s1, %s216
      %p218 = pneg %p64
      %p219 = pneg %p61
      %p220 = pneg %p85
      %p221 = pneg %p82
      %p222 = pneg %p106
      %p223 = pneg %p103
      %p224 = pneg %p132
      %p225 = pneg %p129
      %p226 = scmp.lt.s32.totalorder %s17, 1
      %s227 = scalar_select %p226, %s17, 1
      %s228 = smul.addr %s227, 32
      %s229 = smul.addr %s228, 4
      %s230 = scalar_lea.vmem %s4, %s229
      %p231 = pneg %p158
      %p232 = pneg %p155
      %p233 = scmp.lt.s32.totalorder %s17, 1
      %s234 = scalar_select %p233, %s17, 1
      %s235 = smul.addr %s234, 2
      %s236 = scalar_lea.vmem %s5, %s235
      %p237 = scmp.lt.s32.totalorder %s17, 1
      %s238 = scalar_select %p237, %s17, 1
      %s239 = smul.addr %s238, 48
      %s240 = smul.addr %s239, 4
      %s241 = scalar_lea.vmem %s0, %s240
      %p242 = scmp.lt.s32.totalorder %s17, 1
      %s243 = scalar_select %p242, %s17, 1
      %s244 = smul.addr %s243, 6
      %s245 = smul.addr %s244, 4
      %s246 = scalar_lea.vmem %s1, %s245
      %p247 = scmp.lt.s32.totalorder %s17, 1
      %s248 = scalar_select %p247, %s17, 1
      %s249 = smul.addr %s248, 32
      %s250 = smul.addr %s249, 4
      %s251 = scalar_lea.vmem %s4, %s250
      %p252 = scmp.lt.s32.totalorder %s17, 1
      %s253 = scalar_select %p252, %s17, 1
      %s254 = smul.addr %s253, 2
      %s255 = scalar_lea.vmem %s5, %s254
      %v257 = vld [vmem:[%s246] sm:$0xf]
      %v258 = vld [vmem:[%s246 + $0x4] sm:$0xf]
      %v259 = vld [vmem:[%s246 + $0x8] sm:$0x1]
      %v260 = vld [vmem:[%s241] sm:$0xf]
      %v261 = vld [vmem:[%s241 + $0x4] sm:$0xf]
      %v262 = vld [vmem:[%s241 + $0x8] sm:$0x1]
      %v263 = vld [vmem:[%s241 + $0xc] sm:$0xf]
      %v264 = vld [vmem:[%s241 + $0x10] sm:$0xf]
      %v265 = vld [vmem:[%s241 + $0x14] sm:$0x1]
      %v266 = vld [vmem:[%s241 + $0x18] sm:$0xf]
      %v267 = vld [vmem:[%s241 + $0x1c] sm:$0xf]
      %v268 = vld [vmem:[%s241 + $0x20] sm:$0x1]
      %v269 = vld [vmem:[%s241 + $0x24] sm:$0xf]
      %v270 = vld [vmem:[%s241 + $0x28] sm:$0xf]
      %v271 = vld [vmem:[%s241 + $0x2c] sm:$0x1]
      %v272 = vld [vmem:[%s241 + $0x30] sm:$0xf]
      %v273 = vld [vmem:[%s241 + $0x34] sm:$0xf]
      %v274 = vld [vmem:[%s241 + $0x38] sm:$0x1]
      %v275 = vld [vmem:[%s241 + $0x3c] sm:$0xf]
      %v276 = vld [vmem:[%s241 + $0x40] sm:$0xf]
      %v277 = vld [vmem:[%s241 + $0x44] sm:$0x1]
      %v278 = vld [vmem:[%s241 + $0x48] sm:$0xf]
      %v279 = vld [vmem:[%s241 + $0x4c] sm:$0xf]
      %v280 = vld [vmem:[%s241 + $0x50] sm:$0x1]
      %v281 = vld [vmem:[%s241 + $0x54] sm:$0xf]
      %v282 = vld [vmem:[%s241 + $0x58] sm:$0xf]
      %v283 = vld [vmem:[%s241 + $0x5c] sm:$0x1]
      %v284 = vld [vmem:[%s241 + $0x60] sm:$0xf]
      %v285 = vld [vmem:[%s241 + $0x64] sm:$0xf]
      %v286 = vld [vmem:[%s241 + $0x68] sm:$0x1]
      %v287 = vld [vmem:[%s241 + $0x6c] sm:$0xf]
      %v288 = vld [vmem:[%s241 + $0x70] sm:$0xf]
      %v289 = vld [vmem:[%s241 + $0x74] sm:$0x1]
      %v290 = vld [vmem:[%s241 + $0x78] sm:$0xf]
      %v291 = vld [vmem:[%s241 + $0x7c] sm:$0xf]
      %v292 = vld [vmem:[%s241 + $0x80] sm:$0x1]
      %v293 = vld [vmem:[%s241 + $0x84] sm:$0xf]
      %v294 = vld [vmem:[%s241 + $0x88] sm:$0xf]
      %v295 = vld [vmem:[%s241 + $0x8c] sm:$0x1]
      %v296 = vld [vmem:[%s241 + $0x90] sm:$0xf]
      %v297 = vld [vmem:[%s241 + $0x94] sm:$0xf]
      %v298 = vld [vmem:[%s241 + $0x98] sm:$0x1]
      %v299 = vld [vmem:[%s241 + $0x9c] sm:$0xf]
      %v300 = vld [vmem:[%s241 + $0xa0] sm:$0xf]
      %v301 = vld [vmem:[%s241 + $0xa4] sm:$0x1]
      %v302 = vld [vmem:[%s241 + $0xa8] sm:$0xf]
      %v303 = vld [vmem:[%s241 + $0xac] sm:$0xf]
      %v304 = vld [vmem:[%s241 + $0xb0] sm:$0x1]
      %v305 = vld [vmem:[%s241 + $0xb4] sm:$0xf]
      %v306 = vld [vmem:[%s241 + $0xb8] sm:$0xf]
      %v307 = vld [vmem:[%s241 + $0xbc] sm:$0x1]
      %s308 = scalar_lea.vmem %s246, 12
      %v309 = vld [vmem:[%s308] sm:$0xf]
      %v310 = vld [vmem:[%s308 + $0x4] sm:$0xf]
      %v311 = vld [vmem:[%s308 + $0x8] sm:$0x1]
      %v344 = vunpack.c.l.b16 %v257
      %v345 = vunpack.c.l.b16 %v258
      %v346 = vunpack.c.l.b16 %v260
      %v347 = vunpack.c.l.b16 %v261
      %v348 = vunpack.c.l.b16 %v263
      %v349 = vunpack.c.l.b16 %v264
      %v350 = vunpack.c.l.b16 %v266
      %v351 = vunpack.c.l.b16 %v267
      %v352 = vunpack.c.l.b16 %v269
      %v353 = vunpack.c.l.b16 %v270
      %v354 = vunpack.c.l.b16 %v272
      %v355 = vunpack.c.l.b16 %v273
      %v356 = vunpack.c.l.b16 %v275
      %v357 = vunpack.c.l.b16 %v276
      %v358 = vunpack.c.l.b16 %v278
      %v359 = vunpack.c.l.b16 %v279
      %v360 = vunpack.c.l.b16 %v281
      %v361 = vunpack.c.l.b16 %v282
      %v362 = vunpack.c.l.b16 %v284
      %v363 = vunpack.c.l.b16 %v285
      %v364 = vunpack.c.l.b16 %v287
      %v365 = vunpack.c.l.b16 %v288
      %v366 = vunpack.c.l.b16 %v290
      %v367 = vunpack.c.l.b16 %v291
      %v368 = vunpack.c.l.b16 %v293
      %v369 = vunpack.c.l.b16 %v294
      %v370 = vunpack.c.l.b16 %v296
      %v371 = vunpack.c.l.b16 %v297
      %v372 = vunpack.c.l.b16 %v299
      %v373 = vunpack.c.l.b16 %v300
      %v374 = vunpack.c.l.b16 %v302
      %v375 = vunpack.c.l.b16 %v303
      %v376 = vpack.c.b16 %v345, %v344
      %v377 = vpack.c.b16 %v347, %v346
      %v378 = vpack.c.b16 %v349, %v348
      %v379 = vpack.c.b16 %v351, %v350
      %v380 = vpack.c.b16 %v353, %v352
      %v381 = vpack.c.b16 %v355, %v354
      %v382 = vpack.c.b16 %v357, %v356
      %v383 = vpack.c.b16 %v359, %v358
      %v384 = vpack.c.b16 %v361, %v360
      %v385 = vpack.c.b16 %v363, %v362
      %v386 = vpack.c.b16 %v365, %v364
      %v387 = vpack.c.b16 %v367, %v366
      %v388 = vpack.c.b16 %v369, %v368
      %v389 = vpack.c.b16 %v371, %v370
      %v390 = vpack.c.b16 %v373, %v372
      %v391 = vpack.c.b16 %v375, %v374
      %v408 = vunpack.c.l.b16 %v259
      %v409 = vunpack.c.l.b16 %v262
      %v410 = vunpack.c.l.b16 %v265
      %v411 = vunpack.c.l.b16 %v268
      %v412 = vunpack.c.l.b16 %v271
      %v413 = vunpack.c.l.b16 %v274
      %v414 = vunpack.c.l.b16 %v277
      %v415 = vunpack.c.l.b16 %v280
      %v416 = vunpack.c.l.b16 %v283
      %v417 = vunpack.c.l.b16 %v286
      %v418 = vunpack.c.l.b16 %v289
      %v419 = vunpack.c.l.b16 %v292
      %v420 = vunpack.c.l.b16 %v295
      %v421 = vunpack.c.l.b16 %v298
      %v422 = vunpack.c.l.b16 %v301
      %v423 = vunpack.c.l.b16 %v304
      %v424 = vpack.c.b16 %v408, %v408
      %v425 = vpack.c.b16 %v409, %v409
      %v426 = vpack.c.b16 %v410, %v410
      %v427 = vpack.c.b16 %v411, %v411
      %v428 = vpack.c.b16 %v412, %v412
      %v429 = vpack.c.b16 %v413, %v413
      %v430 = vpack.c.b16 %v414, %v414
      %v431 = vpack.c.b16 %v415, %v415
      %v432 = vpack.c.b16 %v416, %v416
      %v433 = vpack.c.b16 %v417, %v417
      %v434 = vpack.c.b16 %v418, %v418
      %v435 = vpack.c.b16 %v419, %v419
      %v436 = vpack.c.b16 %v420, %v420
      %v437 = vpack.c.b16 %v421, %v421
      %v438 = vpack.c.b16 %v422, %v422
      %v439 = vpack.c.b16 %v423, %v423
      %vm440 = vsmask.f32 7424
      %v442 = vshrl.u32 %v376, 16
      %v444 = vshll.u32 %v376, 16
      %v446 = vrot.slane %v444, 1
      %v447 = vor.u32 %v442, %v446
      %v449 = vshll.u32 %v424, 16
      %v451 = vrot.slane %v449, 1
      %v452 = vsel %vm440, %v447, %v451
      %v454 = vshrl.u32 %v377, 16
      %v456 = vshll.u32 %v377, 16
      %v458 = vrot.slane %v456, 1
      %v459 = vor.u32 %v454, %v458
      %v461 = vshll.u32 %v425, 16
      %v463 = vrot.slane %v461, 1
      %v464 = vsel %vm440, %v459, %v463
      %v466 = vshrl.u32 %v378, 16
      %v468 = vshll.u32 %v378, 16
      %v470 = vrot.slane %v468, 1
      %v471 = vor.u32 %v466, %v470
      %v473 = vshll.u32 %v426, 16
      %v475 = vrot.slane %v473, 1
      %v476 = vsel %vm440, %v471, %v475
      %v478 = vshrl.u32 %v379, 16
      %v480 = vshll.u32 %v379, 16
      %v482 = vrot.slane %v480, 1
      %v483 = vor.u32 %v478, %v482
      %v485 = vshll.u32 %v427, 16
      %v487 = vrot.slane %v485, 1
      %v488 = vsel %vm440, %v483, %v487
      %v490 = vshrl.u32 %v380, 16
      %v492 = vshll.u32 %v380, 16
      %v494 = vrot.slane %v492, 1
      %v495 = vor.u32 %v490, %v494
      %v497 = vshll.u32 %v428, 16
      %v499 = vrot.slane %v497, 1
      %v500 = vsel %vm440, %v495, %v499
      %v502 = vshrl.u32 %v381, 16
      %v504 = vshll.u32 %v381, 16
      %v506 = vrot.slane %v504, 1
      %v507 = vor.u32 %v502, %v506
      %v509 = vshll.u32 %v429, 16
      %v511 = vrot.slane %v509, 1
      %v512 = vsel %vm440, %v507, %v511
      %v514 = vshrl.u32 %v382, 16
      %v516 = vshll.u32 %v382, 16
      %v518 = vrot.slane %v516, 1
      %v519 = vor.u32 %v514, %v518
      %v521 = vshll.u32 %v430, 16
      %v523 = vrot.slane %v521, 1
      %v524 = vsel %vm440, %v519, %v523
      %v526 = vshrl.u32 %v383, 16
      %v528 = vshll.u32 %v383, 16
      %v530 = vrot.slane %v528, 1
      %v531 = vor.u32 %v526, %v530
      %v533 = vshll.u32 %v431, 16
      %v535 = vrot.slane %v533, 1
      %v536 = vsel %vm440, %v531, %v535
      %v538 = vshrl.u32 %v384, 16
      %v540 = vshll.u32 %v384, 16
      %v542 = vrot.slane %v540, 1
      %v543 = vor.u32 %v538, %v542
      %v545 = vshll.u32 %v432, 16
      %v547 = vrot.slane %v545, 1
      %v548 = vsel %vm440, %v543, %v547
      %v550 = vshrl.u32 %v385, 16
      %v552 = vshll.u32 %v385, 16
      %v554 = vrot.slane %v552, 1
      %v555 = vor.u32 %v550, %v554
      %v557 = vshll.u32 %v433, 16
      %v559 = vrot.slane %v557, 1
      %v560 = vsel %vm440, %v555, %v559
      %v562 = vshrl.u32 %v386, 16
      %v564 = vshll.u32 %v386, 16
      %v566 = vrot.slane %v564, 1
      %v567 = vor.u32 %v562, %v566
      %v569 = vshll.u32 %v434, 16
      %v571 = vrot.slane %v569, 1
      %v572 = vsel %vm440, %v567, %v571
      %v574 = vshrl.u32 %v387, 16
      %v576 = vshll.u32 %v387, 16
      %v578 = vrot.slane %v576, 1
      %v579 = vor.u32 %v574, %v578
      %v581 = vshll.u32 %v435, 16
      %v583 = vrot.slane %v581, 1
      %v584 = vsel %vm440, %v579, %v583
      %v586 = vshrl.u32 %v388, 16
      %v588 = vshll.u32 %v388, 16
      %v590 = vrot.slane %v588, 1
      %v591 = vor.u32 %v586, %v590
      %v593 = vshll.u32 %v436, 16
      %v595 = vrot.slane %v593, 1
      %v596 = vsel %vm440, %v591, %v595
      %v598 = vshrl.u32 %v389, 16
      %v600 = vshll.u32 %v389, 16
      %v602 = vrot.slane %v600, 1
      %v603 = vor.u32 %v598, %v602
      %v605 = vshll.u32 %v437, 16
      %v607 = vrot.slane %v605, 1
      %v608 = vsel %vm440, %v603, %v607
      %v610 = vshrl.u32 %v390, 16
      %v612 = vshll.u32 %v390, 16
      %v614 = vrot.slane %v612, 1
      %v615 = vor.u32 %v610, %v614
      %v617 = vshll.u32 %v438, 16
      %v619 = vrot.slane %v617, 1
      %v620 = vsel %vm440, %v615, %v619
      %v622 = vshrl.u32 %v391, 16
      %v624 = vshll.u32 %v391, 16
      %v626 = vrot.slane %v624, 1
      %v627 = vor.u32 %v622, %v626
      %v629 = vshll.u32 %v439, 16
      %v631 = vrot.slane %v629, 1
      %v632 = vsel %vm440, %v627, %v631
      %633 = vrot.lane.b32.xlu0 %v452, 4
      %v634 = vpop.permute.xlu0 %633
      %635 = vrot.lane.b32.xlu0 %v464, 4
      %v636 = vpop.permute.xlu0 %635
      %637 = vrot.lane.b32.xlu0 %v476, 4
      %v638 = vpop.permute.xlu0 %637
      %639 = vrot.lane.b32.xlu0 %v488, 4
      %v640 = vpop.permute.xlu0 %639
      %641 = vrot.lane.b32.xlu0 %v500, 4
      %v642 = vpop.permute.xlu0 %641
      %643 = vrot.lane.b32.xlu0 %v512, 4
      %v644 = vpop.permute.xlu0 %643
      %645 = vrot.lane.b32.xlu0 %v524, 4
      %v646 = vpop.permute.xlu0 %645
      %647 = vrot.lane.b32.xlu0 %v536, 4
      %v648 = vpop.permute.xlu0 %647
      %649 = vrot.lane.b32.xlu0 %v548, 4
      %v650 = vpop.permute.xlu0 %649
      %651 = vrot.lane.b32.xlu0 %v560, 4
      %v652 = vpop.permute.xlu0 %651
      %653 = vrot.lane.b32.xlu0 %v572, 4
      %v654 = vpop.permute.xlu0 %653
      %655 = vrot.lane.b32.xlu0 %v584, 4
      %v656 = vpop.permute.xlu0 %655
      %657 = vrot.lane.b32.xlu0 %v596, 4
      %v658 = vpop.permute.xlu0 %657
      %659 = vrot.lane.b32.xlu0 %v608, 4
      %v660 = vpop.permute.xlu0 %659
      %661 = vrot.lane.b32.xlu0 %v620, 4
      %v662 = vpop.permute.xlu0 %661
      %663 = vrot.lane.b32.xlu0 %v632, 4
      %v664 = vpop.permute.xlu0 %663
      %vm665 = vcmask 1046528
      %v666 = vrot.slane %v376, 1
      %v667 = vrot.slane %v424, 1
      %v668 = vsel %vm665, %v666, %v667
      %v669 = vrot.slane %v377, 1
      %v670 = vrot.slane %v425, 1
      %v671 = vsel %vm665, %v669, %v670
      %v672 = vrot.slane %v378, 1
      %v673 = vrot.slane %v426, 1
      %v674 = vsel %vm665, %v672, %v673
      %v675 = vrot.slane %v379, 1
      %v676 = vrot.slane %v427, 1
      %v677 = vsel %vm665, %v675, %v676
      %v678 = vrot.slane %v380, 1
      %v679 = vrot.slane %v428, 1
      %v680 = vsel %vm665, %v678, %v679
      %v681 = vrot.slane %v381, 1
      %v682 = vrot.slane %v429, 1
      %v683 = vsel %vm665, %v681, %v682
      %v684 = vrot.slane %v382, 1
      %v685 = vrot.slane %v430, 1
      %v686 = vsel %vm665, %v684, %v685
      %v687 = vrot.slane %v383, 1
      %v688 = vrot.slane %v431, 1
      %v689 = vsel %vm665, %v687, %v688
      %v690 = vrot.slane %v384, 1
      %v691 = vrot.slane %v432, 1
      %v692 = vsel %vm665, %v690, %v691
      %v693 = vrot.slane %v385, 1
      %v694 = vrot.slane %v433, 1
      %v695 = vsel %vm665, %v693, %v694
      %v696 = vrot.slane %v386, 1
      %v697 = vrot.slane %v434, 1
      %v698 = vsel %vm665, %v696, %v697
      %v699 = vrot.slane %v387, 1
      %v700 = vrot.slane %v435, 1
      %v701 = vsel %vm665, %v699, %v700
      %v702 = vrot.slane %v388, 1
      %v703 = vrot.slane %v436, 1
      %v704 = vsel %vm665, %v702, %v703
      %v705 = vrot.slane %v389, 1
      %v706 = vrot.slane %v437, 1
      %v707 = vsel %vm665, %v705, %v706
      %v708 = vrot.slane %v390, 1
      %v709 = vrot.slane %v438, 1
      %v710 = vsel %vm665, %v708, %v709
      %v711 = vrot.slane %v391, 1
      %v712 = vrot.slane %v439, 1
      %v713 = vsel %vm665, %v711, %v712
      %714 = vrot.lane.b32.xlu0 %v668, 8
      %v715 = vpop.permute.xlu0 %714
      %716 = vrot.lane.b32.xlu0 %v671, 8
      %v717 = vpop.permute.xlu0 %716
      %718 = vrot.lane.b32.xlu0 %v674, 8
      %v719 = vpop.permute.xlu0 %718
      %720 = vrot.lane.b32.xlu0 %v677, 8
      %v721 = vpop.permute.xlu0 %720
      %722 = vrot.lane.b32.xlu0 %v680, 8
      %v723 = vpop.permute.xlu0 %722
      %724 = vrot.lane.b32.xlu0 %v683, 8
      %v725 = vpop.permute.xlu0 %724
      %726 = vrot.lane.b32.xlu0 %v686, 8
      %v727 = vpop.permute.xlu0 %726
      %728 = vrot.lane.b32.xlu0 %v689, 8
      %v729 = vpop.permute.xlu0 %728
      %730 = vrot.lane.b32.xlu0 %v692, 8
      %v731 = vpop.permute.xlu0 %730
      %732 = vrot.lane.b32.xlu0 %v695, 8
      %v733 = vpop.permute.xlu0 %732
      %734 = vrot.lane.b32.xlu0 %v698, 8
      %v735 = vpop.permute.xlu0 %734
      %736 = vrot.lane.b32.xlu0 %v701, 8
      %v737 = vpop.permute.xlu0 %736
      %738 = vrot.lane.b32.xlu0 %v704, 8
      %v739 = vpop.permute.xlu0 %738
      %740 = vrot.lane.b32.xlu0 %v707, 8
      %v741 = vpop.permute.xlu0 %740
      %742 = vrot.lane.b32.xlu0 %v710, 8
      %v743 = vpop.permute.xlu0 %742
      %744 = vrot.lane.b32.xlu0 %v713, 8
      %v745 = vpop.permute.xlu0 %744
      %v748 = vunpack.c.l.b16 %v305
      %v749 = vunpack.c.l.b16 %v306
      %v750 = vpack.c.b16 %v749, %v748
      %751 = vrot.lane.b32.xlu0 %v377, 12
      %v752 = vpop.permute.xlu0 %751
      %753 = vrot.lane.b32.xlu0 %v378, 12
      %v754 = vpop.permute.xlu0 %753
      %755 = vrot.lane.b32.xlu0 %v379, 12
      %v756 = vpop.permute.xlu0 %755
      %757 = vrot.lane.b32.xlu0 %v380, 12
      %v758 = vpop.permute.xlu0 %757
      %759 = vrot.lane.b32.xlu0 %v381, 12
      %v760 = vpop.permute.xlu0 %759
      %761 = vrot.lane.b32.xlu0 %v382, 12
      %v762 = vpop.permute.xlu0 %761
      %763 = vrot.lane.b32.xlu0 %v383, 12
      %v764 = vpop.permute.xlu0 %763
      %765 = vrot.lane.b32.xlu0 %v384, 12
      %v766 = vpop.permute.xlu0 %765
      %767 = vrot.lane.b32.xlu0 %v385, 12
      %v768 = vpop.permute.xlu0 %767
      %769 = vrot.lane.b32.xlu0 %v386, 12
      %v770 = vpop.permute.xlu0 %769
      %771 = vrot.lane.b32.xlu0 %v387, 12
      %v772 = vpop.permute.xlu0 %771
      %773 = vrot.lane.b32.xlu0 %v388, 12
      %v774 = vpop.permute.xlu0 %773
      %775 = vrot.lane.b32.xlu0 %v389, 12
      %v776 = vpop.permute.xlu0 %775
      %777 = vrot.lane.b32.xlu0 %v390, 12
      %v778 = vpop.permute.xlu0 %777
      %779 = vrot.lane.b32.xlu0 %v391, 12
      %v780 = vpop.permute.xlu0 %779
      %781 = vrot.lane.b32.xlu0 %v750, 12
      %v782 = vpop.permute.xlu0 %781
      %v784 = vunpack.c.l.b16 %v307
      %v785 = vpack.c.b16 %v784, %v784
      %v787 = vshrl.u32 %v750, 16
      %v789 = vshll.u32 %v750, 16
      %v791 = vrot.slane %v789, 1
      %v792 = vor.u32 %v787, %v791
      %v794 = vshll.u32 %v785, 16
      %v796 = vrot.slane %v794, 1
      %v797 = vsel %vm440, %v792, %v796
      %798 = vrot.lane.b32.xlu0 %v464, 16
      %v799 = vpop.permute.xlu0 %798
      %800 = vrot.lane.b32.xlu0 %v476, 16
      %v801 = vpop.permute.xlu0 %800
      %802 = vrot.lane.b32.xlu0 %v488, 16
      %v803 = vpop.permute.xlu0 %802
      %804 = vrot.lane.b32.xlu0 %v500, 16
      %v805 = vpop.permute.xlu0 %804
      %806 = vrot.lane.b32.xlu0 %v512, 16
      %v807 = vpop.permute.xlu0 %806
      %808 = vrot.lane.b32.xlu0 %v524, 16
      %v809 = vpop.permute.xlu0 %808
      %810 = vrot.lane.b32.xlu0 %v536, 16
      %v811 = vpop.permute.xlu0 %810
      %812 = vrot.lane.b32.xlu0 %v548, 16
      %v813 = vpop.permute.xlu0 %812
      %814 = vrot.lane.b32.xlu0 %v560, 16
      %v815 = vpop.permute.xlu0 %814
      %816 = vrot.lane.b32.xlu0 %v572, 16
      %v817 = vpop.permute.xlu0 %816
      %818 = vrot.lane.b32.xlu0 %v584, 16
      %v819 = vpop.permute.xlu0 %818
      %820 = vrot.lane.b32.xlu0 %v596, 16
      %v821 = vpop.permute.xlu0 %820
      %822 = vrot.lane.b32.xlu0 %v608, 16
      %v823 = vpop.permute.xlu0 %822
      %824 = vrot.lane.b32.xlu0 %v620, 16
      %v825 = vpop.permute.xlu0 %824
      %826 = vrot.lane.b32.xlu0 %v632, 16
      %v827 = vpop.permute.xlu0 %826
      %828 = vrot.lane.b32.xlu0 %v797, 16
      %v829 = vpop.permute.xlu0 %828
      %v830 = vrot.slane %v750, 1
      %v831 = vrot.slane %v785, 1
      %v832 = vsel %vm665, %v830, %v831
      %833 = vrot.lane.b32.xlu0 %v671, 20
      %v834 = vpop.permute.xlu0 %833
      %835 = vrot.lane.b32.xlu0 %v674, 20
      %v836 = vpop.permute.xlu0 %835
      %837 = vrot.lane.b32.xlu0 %v677, 20
      %v838 = vpop.permute.xlu0 %837
      %839 = vrot.lane.b32.xlu0 %v680, 20
      %v840 = vpop.permute.xlu0 %839
      %841 = vrot.lane.b32.xlu0 %v683, 20
      %v842 = vpop.permute.xlu0 %841
      %843 = vrot.lane.b32.xlu0 %v686, 20
      %v844 = vpop.permute.xlu0 %843
      %845 = vrot.lane.b32.xlu0 %v689, 20
      %v846 = vpop.permute.xlu0 %845
      %847 = vrot.lane.b32.xlu0 %v692, 20
      %v848 = vpop.permute.xlu0 %847
      %849 = vrot.lane.b32.xlu0 %v695, 20
      %v850 = vpop.permute.xlu0 %849
      %851 = vrot.lane.b32.xlu0 %v698, 20
      %v852 = vpop.permute.xlu0 %851
      %853 = vrot.lane.b32.xlu0 %v701, 20
      %v854 = vpop.permute.xlu0 %853
      %855 = vrot.lane.b32.xlu0 %v704, 20
      %v856 = vpop.permute.xlu0 %855
      %857 = vrot.lane.b32.xlu0 %v707, 20
      %v858 = vpop.permute.xlu0 %857
      %859 = vrot.lane.b32.xlu0 %v710, 20
      %v860 = vpop.permute.xlu0 %859
      %861 = vrot.lane.b32.xlu0 %v713, 20
      %v862 = vpop.permute.xlu0 %861
      %863 = vrot.lane.b32.xlu0 %v832, 20
      %v864 = vpop.permute.xlu0 %863
      %v867 = vunpack.c.l.b16 %v309
      %v868 = vunpack.c.l.b16 %v310
      %v869 = vpack.c.b16 %v868, %v867
      %870 = vrot.lane.b32.xlu0 %v378, 24
      %v871 = vpop.permute.xlu0 %870
      %872 = vrot.lane.b32.xlu0 %v379, 24
      %v873 = vpop.permute.xlu0 %872
      %874 = vrot.lane.b32.xlu0 %v380, 24
      %v875 = vpop.permute.xlu0 %874
      %876 = vrot.lane.b32.xlu0 %v381, 24
      %v877 = vpop.permute.xlu0 %876
      %878 = vrot.lane.b32.xlu0 %v382, 24
      %v879 = vpop.permute.xlu0 %878
      %880 = vrot.lane.b32.xlu0 %v383, 24
      %v881 = vpop.permute.xlu0 %880
      %882 = vrot.lane.b32.xlu0 %v384, 24
      %v883 = vpop.permute.xlu0 %882
      %884 = vrot.lane.b32.xlu0 %v385, 24
      %v885 = vpop.permute.xlu0 %884
      %886 = vrot.lane.b32.xlu0 %v386, 24
      %v887 = vpop.permute.xlu0 %886
      %888 = vrot.lane.b32.xlu0 %v387, 24
      %v889 = vpop.permute.xlu0 %888
      %890 = vrot.lane.b32.xlu0 %v388, 24
      %v891 = vpop.permute.xlu0 %890
      %892 = vrot.lane.b32.xlu0 %v389, 24
      %v893 = vpop.permute.xlu0 %892
      %894 = vrot.lane.b32.xlu0 %v390, 24
      %v895 = vpop.permute.xlu0 %894
      %896 = vrot.lane.b32.xlu0 %v391, 24
      %v897 = vpop.permute.xlu0 %896
      %898 = vrot.lane.b32.xlu0 %v750, 24
      %v899 = vpop.permute.xlu0 %898
      %900 = vrot.lane.b32.xlu0 %v869, 24
      %v901 = vpop.permute.xlu0 %900
      %v903 = vunpack.c.l.b16 %v311
      %v904 = vpack.c.b16 %v903, %v903
      %v906 = vshrl.u32 %v869, 16
      %v908 = vshll.u32 %v869, 16
      %v910 = vrot.slane %v908, 1
      %v911 = vor.u32 %v906, %v910
      %v913 = vshll.u32 %v904, 16
      %v915 = vrot.slane %v913, 1
      %v916 = vsel %vm440, %v911, %v915
      %917 = vrot.lane.b32.xlu0 %v476, 28
      %v918 = vpop.permute.xlu0 %917
      %919 = vrot.lane.b32.xlu0 %v488, 28
      %v920 = vpop.permute.xlu0 %919
      %921 = vrot.lane.b32.xlu0 %v500, 28
      %v922 = vpop.permute.xlu0 %921
      %923 = vrot.lane.b32.xlu0 %v512, 28
      %v924 = vpop.permute.xlu0 %923
      %925 = vrot.lane.b32.xlu0 %v524, 28
      %v926 = vpop.permute.xlu0 %925
      %927 = vrot.lane.b32.xlu0 %v536, 28
      %v928 = vpop.permute.xlu0 %927
      %929 = vrot.lane.b32.xlu0 %v548, 28
      %v930 = vpop.permute.xlu0 %929
      %931 = vrot.lane.b32.xlu0 %v560, 28
      %v932 = vpop.permute.xlu0 %931
      %933 = vrot.lane.b32.xlu0 %v572, 28
      %v934 = vpop.permute.xlu0 %933
      %935 = vrot.lane.b32.xlu0 %v584, 28
      %v936 = vpop.permute.xlu0 %935
      %937 = vrot.lane.b32.xlu0 %v596, 28
      %v938 = vpop.permute.xlu0 %937
      %939 = vrot.lane.b32.xlu0 %v608, 28
      %v940 = vpop.permute.xlu0 %939
      %941 = vrot.lane.b32.xlu0 %v620, 28
      %v942 = vpop.permute.xlu0 %941
      %943 = vrot.lane.b32.xlu0 %v632, 28
      %v944 = vpop.permute.xlu0 %943
      %945 = vrot.lane.b32.xlu0 %v797, 28
      %v946 = vpop.permute.xlu0 %945
      %947 = vrot.lane.b32.xlu0 %v916, 28
      %v948 = vpop.permute.xlu0 %947
      %v949 = vrot.slane %v869, 1
      %v950 = vrot.slane %v904, 1
      %v951 = vsel %vm665, %v949, %v950
      %952 = vrot.lane.b32.xlu0 %v674, 32
      %v953 = vpop.permute.xlu0 %952
      %954 = vrot.lane.b32.xlu0 %v677, 32
      %v955 = vpop.permute.xlu0 %954
      %956 = vrot.lane.b32.xlu0 %v680, 32
      %v957 = vpop.permute.xlu0 %956
      %958 = vrot.lane.b32.xlu0 %v683, 32
      %v959 = vpop.permute.xlu0 %958
      %960 = vrot.lane.b32.xlu0 %v686, 32
      %v961 = vpop.permute.xlu0 %960
      %962 = vrot.lane.b32.xlu0 %v689, 32
      %v963 = vpop.permute.xlu0 %962
      %964 = vrot.lane.b32.xlu0 %v692, 32
      %v965 = vpop.permute.xlu0 %964
      %966 = vrot.lane.b32.xlu0 %v695, 32
      %v967 = vpop.permute.xlu0 %966
      %968 = vrot.lane.b32.xlu0 %v698, 32
      %v969 = vpop.permute.xlu0 %968
      %970 = vrot.lane.b32.xlu0 %v701, 32
      %v971 = vpop.permute.xlu0 %970
      %972 = vrot.lane.b32.xlu0 %v704, 32
      %v973 = vpop.permute.xlu0 %972
      %974 = vrot.lane.b32.xlu0 %v707, 32
      %v975 = vpop.permute.xlu0 %974
      %976 = vrot.lane.b32.xlu0 %v710, 32
      %v977 = vpop.permute.xlu0 %976
      %978 = vrot.lane.b32.xlu0 %v713, 32
      %v979 = vpop.permute.xlu0 %978
      %980 = vrot.lane.b32.xlu0 %v832, 32
      %v981 = vpop.permute.xlu0 %980
      %982 = vrot.lane.b32.xlu0 %v951, 32
      %v983 = vpop.permute.xlu0 %982
      %vm984 = vcmask 31744
      %v986 = vsel %vm984, %v376, %v634
      %v988 = vsel %vm984, %v377, %v636
      %v990 = vsel %vm984, %v378, %v638
      %v992 = vsel %vm984, %v379, %v640
      %v994 = vsel %vm984, %v380, %v642
      %v996 = vsel %vm984, %v381, %v644
      %v998 = vsel %vm984, %v382, %v646
      %v1000 = vsel %vm984, %v383, %v648
      %v1002 = vsel %vm984, %v384, %v650
      %v1004 = vsel %vm984, %v385, %v652
      %v1006 = vsel %vm984, %v386, %v654
      %v1008 = vsel %vm984, %v387, %v656
      %v1010 = vsel %vm984, %v388, %v658
      %v1012 = vsel %vm984, %v389, %v660
      %v1014 = vsel %vm984, %v390, %v662
      %v1016 = vsel %vm984, %v391, %v664
      %vm1017 = vcmask 64512
      %v1019 = vsel %vm1017, %v986, %v715
      %v1021 = vsel %vm1017, %v988, %v717
      %v1023 = vsel %vm1017, %v990, %v719
      %v1025 = vsel %vm1017, %v992, %v721
      %v1027 = vsel %vm1017, %v994, %v723
      %v1029 = vsel %vm1017, %v996, %v725
      %v1031 = vsel %vm1017, %v998, %v727
      %v1033 = vsel %vm1017, %v1000, %v729
      %v1035 = vsel %vm1017, %v1002, %v731
      %v1037 = vsel %vm1017, %v1004, %v733
      %v1039 = vsel %vm1017, %v1006, %v735
      %v1041 = vsel %vm1017, %v1008, %v737
      %v1043 = vsel %vm1017, %v1010, %v739
      %v1045 = vsel %vm1017, %v1012, %v741
      %v1047 = vsel %vm1017, %v1014, %v743
      %v1049 = vsel %vm1017, %v1016, %v745
      %vm1050 = vcmask 97280
      %v1052 = vsel %vm1050, %v1019, %v752
      %v1054 = vsel %vm1050, %v1021, %v754
      %v1056 = vsel %vm1050, %v1023, %v756
      %v1058 = vsel %vm1050, %v1025, %v758
      %v1060 = vsel %vm1050, %v1027, %v760
      %v1062 = vsel %vm1050, %v1029, %v762
      %v1064 = vsel %vm1050, %v1031, %v764
      %v1066 = vsel %vm1050, %v1033, %v766
      %v1068 = vsel %vm1050, %v1035, %v768
      %v1070 = vsel %vm1050, %v1037, %v770
      %v1072 = vsel %vm1050, %v1039, %v772
      %v1074 = vsel %vm1050, %v1041, %v774
      %v1076 = vsel %vm1050, %v1043, %v776
      %v1078 = vsel %vm1050, %v1045, %v778
      %v1080 = vsel %vm1050, %v1047, %v780
      %v1082 = vsel %vm1050, %v1049, %v782
      %vm1083 = vcmask 130048
      %v1085 = vsel %vm1083, %v1052, %v799
      %v1087 = vsel %vm1083, %v1054, %v801
      %v1089 = vsel %vm1083, %v1056, %v803
      %v1091 = vsel %vm1083, %v1058, %v805
      %v1093 = vsel %vm1083, %v1060, %v807
      %v1095 = vsel %vm1083, %v1062, %v809
      %v1097 = vsel %vm1083, %v1064, %v811
      %v1099 = vsel %vm1083, %v1066, %v813
      %v1101 = vsel %vm1083, %v1068, %v815
      %v1103 = vsel %vm1083, %v1070, %v817
      %v1105 = vsel %vm1083, %v1072, %v819
      %v1107 = vsel %vm1083, %v1074, %v821
      %v1109 = vsel %vm1083, %v1076, %v823
      %v1111 = vsel %vm1083, %v1078, %v825
      %v1113 = vsel %vm1083, %v1080, %v827
      %v1115 = vsel %vm1083, %v1082, %v829
      %vm1116 = vcmask 162816
      %v1118 = vsel %vm1116, %v1085, %v834
      %v1120 = vsel %vm1116, %v1087, %v836
      %v1122 = vsel %vm1116, %v1089, %v838
      %v1124 = vsel %vm1116, %v1091, %v840
      %v1126 = vsel %vm1116, %v1093, %v842
      %v1128 = vsel %vm1116, %v1095, %v844
      %v1130 = vsel %vm1116, %v1097, %v846
      %v1132 = vsel %vm1116, %v1099, %v848
      %v1134 = vsel %vm1116, %v1101, %v850
      %v1136 = vsel %vm1116, %v1103, %v852
      %v1138 = vsel %vm1116, %v1105, %v854
      %v1140 = vsel %vm1116, %v1107, %v856
      %v1142 = vsel %vm1116, %v1109, %v858
      %v1144 = vsel %vm1116, %v1111, %v860
      %v1146 = vsel %vm1116, %v1113, %v862
      %v1148 = vsel %vm1116, %v1115, %v864
      %vm1149 = vcmask 195584
      %v1151 = vsel %vm1149, %v1118, %v871
      %v1153 = vsel %vm1149, %v1120, %v873
      %v1155 = vsel %vm1149, %v1122, %v875
      %v1157 = vsel %vm1149, %v1124, %v877
      %v1159 = vsel %vm1149, %v1126, %v879
      %v1161 = vsel %vm1149, %v1128, %v881
      %v1163 = vsel %vm1149, %v1130, %v883
      %v1165 = vsel %vm1149, %v1132, %v885
      %v1167 = vsel %vm1149, %v1134, %v887
      %v1169 = vsel %vm1149, %v1136, %v889
      %v1171 = vsel %vm1149, %v1138, %v891
      %v1173 = vsel %vm1149, %v1140, %v893
      %v1175 = vsel %vm1149, %v1142, %v895
      %v1177 = vsel %vm1149, %v1144, %v897
      %v1179 = vsel %vm1149, %v1146, %v899
      %v1181 = vsel %vm1149, %v1148, %v901
      %vm1182 = vcmask 228352
      %v1184 = vsel %vm1182, %v1151, %v918
      %v1186 = vsel %vm1182, %v1153, %v920
      %v1188 = vsel %vm1182, %v1155, %v922
      %v1190 = vsel %vm1182, %v1157, %v924
      %v1192 = vsel %vm1182, %v1159, %v926
      %v1194 = vsel %vm1182, %v1161, %v928
      %v1196 = vsel %vm1182, %v1163, %v930
      %v1198 = vsel %vm1182, %v1165, %v932
      %v1200 = vsel %vm1182, %v1167, %v934
      %v1202 = vsel %vm1182, %v1169, %v936
      %v1204 = vsel %vm1182, %v1171, %v938
      %v1206 = vsel %vm1182, %v1173, %v940
      %v1208 = vsel %vm1182, %v1175, %v942
      %v1210 = vsel %vm1182, %v1177, %v944
      %v1212 = vsel %vm1182, %v1179, %v946
      %v1214 = vsel %vm1182, %v1181, %v948
      %vm1215 = vcmask 261120
      %v1217 = vsel %vm1215, %v1184, %v953
      %v1219 = vsel %vm1215, %v1186, %v955
      %v1221 = vsel %vm1215, %v1188, %v957
      %v1223 = vsel %vm1215, %v1190, %v959
      %v1225 = vsel %vm1215, %v1192, %v961
      %v1227 = vsel %vm1215, %v1194, %v963
      %v1229 = vsel %vm1215, %v1196, %v965
      %v1231 = vsel %vm1215, %v1198, %v967
      %v1233 = vsel %vm1215, %v1200, %v969
      %v1235 = vsel %vm1215, %v1202, %v971
      %v1237 = vsel %vm1215, %v1204, %v973
      %v1239 = vsel %vm1215, %v1206, %v975
      %v1241 = vsel %vm1215, %v1208, %v977
      %v1243 = vsel %vm1215, %v1210, %v979
      %v1245 = vsel %vm1215, %v1212, %v981
      %v1247 = vsel %vm1215, %v1214, %v983
      %vm1248 = vcmask 293888
      %v1250 = vsel %vm1248, %v1217, 0
      %v1252 = vsel %vm1248, %v1219, 0
      %v1254 = vsel %vm1248, %v1221, 0
      %v1256 = vsel %vm1248, %v1223, 0
      %v1258 = vsel %vm1248, %v1225, 0
      %v1260 = vsel %vm1248, %v1227, 0
      %v1262 = vsel %vm1248, %v1229, 0
      %v1264 = vsel %vm1248, %v1231, 0
      %v1266 = vsel %vm1248, %v1233, 0
      %v1268 = vsel %vm1248, %v1235, 0
      %v1270 = vsel %vm1248, %v1237, 0
      %v1272 = vsel %vm1248, %v1239, 0
      %v1274 = vsel %vm1248, %v1241, 0
      %v1276 = vsel %vm1248, %v1243, 0
      %v1278 = vsel %vm1248, %v1245, 0
      %v1280 = vsel %vm1248, %v1247, 0
      %v1282 = vld [vmem:[%s2] sm:$0xf]
      %v1283 = vld [vmem:[%s2 + $0x4] sm:$0xf]
      %v1284 = vld [vmem:[%s2 + $0x8] sm:$0xf]
      %v1285 = vld [vmem:[%s2 + $0xc] sm:$0xf]
      %v1286 = vld [vmem:[%s2 + $0x10] sm:$0xf]
      %v1287 = vld [vmem:[%s2 + $0x14] sm:$0xf]
      %v1288 = vld [vmem:[%s2 + $0x18] sm:$0xf]
      %v1289 = vld [vmem:[%s2 + $0x1c] sm:$0xf]
      %v1290 = vld [vmem:[%s2 + $0x20] sm:$0xf]
      %v1291 = vld [vmem:[%s2 + $0x24] sm:$0xf]
      %v1292 = vld [vmem:[%s2 + $0x28] sm:$0xf]
      %v1293 = vld [vmem:[%s2 + $0x2c] sm:$0xf]
      %v1294 = vld [vmem:[%s2 + $0x30] sm:$0xf]
      %v1295 = vld [vmem:[%s2 + $0x34] sm:$0xf]
      %v1296 = vld [vmem:[%s2 + $0x38] sm:$0xf]
      %v1297 = vld [vmem:[%s2 + $0x3c] sm:$0xf]
      %v1298 = vld [vmem:[%s3] sm:$0x1]
      %v1300 = vperm.slane %v1298, 0
      %v1318 = vunpack.c.l.b16 %v1282
      %v1319 = vunpack.c.l.b16 %v1283
      %v1320 = vunpack.c.l.b16 %v1284
      %v1321 = vunpack.c.l.b16 %v1285
      %v1322 = vunpack.c.l.b16 %v1286
      %v1323 = vunpack.c.l.b16 %v1287
      %v1324 = vunpack.c.l.b16 %v1288
      %v1325 = vunpack.c.l.b16 %v1289
      %v1326 = vunpack.c.l.b16 %v1290
      %v1327 = vunpack.c.l.b16 %v1291
      %v1328 = vunpack.c.l.b16 %v1292
      %v1329 = vunpack.c.l.b16 %v1293
      %v1330 = vunpack.c.l.b16 %v1294
      %v1331 = vunpack.c.l.b16 %v1295
      %v1332 = vunpack.c.l.b16 %v1296
      %v1333 = vunpack.c.l.b16 %v1297
      %v1334 = vpack.c.b16 %v1319, %v1318
      %v1335 = vpack.c.b16 %v1321, %v1320
      %v1336 = vpack.c.b16 %v1323, %v1322
      %v1337 = vpack.c.b16 %v1325, %v1324
      %v1338 = vpack.c.b16 %v1327, %v1326
      %v1339 = vpack.c.b16 %v1329, %v1328
      %v1340 = vpack.c.b16 %v1331, %v1330
      %v1341 = vpack.c.b16 %v1333, %v1332
      %1350 = vmatpush.bf16.msra.mxu0 %v1341
      %1351 = vmatpush.bf16.msra.mxu0 %v1340
      %1352 = vmatpush.bf16.msra.mxu0 %v1339
      %1353 = vmatpush.bf16.msra.mxu0 %v1338
      %1354 = vmatpush.bf16.msra.mxu0 %v1337
      %1355 = vmatpush.bf16.msra.mxu0 %v1336
      %1356 = vmatpush.bf16.msra.mxu0 %v1335
      %1357 = vmatpush.bf16.msra.mxu0 %v1334
      %1358 = vmatmul.bf16.gmra.mxu0 %v1250
      %v1359 = vpop.f32.mrf.mxu0
      %v1360 = vadd.f32 %v1300, %v1359
      %v1361 = vpop.f32.mrf.mxu0
      %v1362 = vadd.f32 %v1300, %v1361
      %1363 = vmatmul.bf16.gmra.mxu0 %v1252
      %v1364 = vpop.f32.mrf.mxu0
      %v1365 = vadd.f32 %v1300, %v1364
      %v1366 = vpop.f32.mrf.mxu0
      %v1367 = vadd.f32 %v1300, %v1366
      %1368 = vmatmul.bf16.gmra.mxu0 %v1254
      %v1369 = vpop.f32.mrf.mxu0
      %v1370 = vadd.f32 %v1300, %v1369
      %v1371 = vpop.f32.mrf.mxu0
      %v1372 = vadd.f32 %v1300, %v1371
      %1373 = vmatmul.bf16.gmra.mxu0 %v1256
      %v1374 = vpop.f32.mrf.mxu0
      %v1375 = vadd.f32 %v1300, %v1374
      %v1376 = vpop.f32.mrf.mxu0
      %v1377 = vadd.f32 %v1300, %v1376
      %1378 = vmatmul.bf16.gmra.mxu0 %v1258
      %v1379 = vpop.f32.mrf.mxu0
      %v1380 = vadd.f32 %v1300, %v1379
      %v1381 = vpop.f32.mrf.mxu0
      %v1382 = vadd.f32 %v1300, %v1381
      %1383 = vmatmul.bf16.gmra.mxu0 %v1260
      %v1384 = vpop.f32.mrf.mxu0
      %v1385 = vadd.f32 %v1300, %v1384
      %v1386 = vpop.f32.mrf.mxu0
      %v1387 = vadd.f32 %v1300, %v1386
      %1388 = vmatmul.bf16.gmra.mxu0 %v1262
      %v1389 = vpop.f32.mrf.mxu0
      %v1390 = vadd.f32 %v1300, %v1389
      %v1391 = vpop.f32.mrf.mxu0
      %v1392 = vadd.f32 %v1300, %v1391
      %1393 = vmatmul.bf16.gmra.mxu0 %v1264
      %v1394 = vpop.f32.mrf.mxu0
      %v1395 = vadd.f32 %v1300, %v1394
      %v1396 = vpop.f32.mrf.mxu0
      %v1397 = vadd.f32 %v1300, %v1396
      %1398 = vmatmul.bf16.gmra.mxu0 %v1266
      %v1399 = vpop.f32.mrf.mxu0
      %v1400 = vadd.f32 %v1300, %v1399
      %v1401 = vpop.f32.mrf.mxu0
      %v1402 = vadd.f32 %v1300, %v1401
      %1403 = vmatmul.bf16.gmra.mxu0 %v1268
      %v1404 = vpop.f32.mrf.mxu0
      %v1405 = vadd.f32 %v1300, %v1404
      %v1406 = vpop.f32.mrf.mxu0
      %v1407 = vadd.f32 %v1300, %v1406
      %1408 = vmatmul.bf16.gmra.mxu0 %v1270
      %v1409 = vpop.f32.mrf.mxu0
      %v1410 = vadd.f32 %v1300, %v1409
      %v1411 = vpop.f32.mrf.mxu0
      %v1412 = vadd.f32 %v1300, %v1411
      %1413 = vmatmul.bf16.gmra.mxu0 %v1272
      %v1414 = vpop.f32.mrf.mxu0
      %v1415 = vadd.f32 %v1300, %v1414
      %v1416 = vpop.f32.mrf.mxu0
      %v1417 = vadd.f32 %v1300, %v1416
      %1418 = vmatmul.bf16.gmra.mxu0 %v1274
      %v1419 = vpop.f32.mrf.mxu0
      %v1420 = vadd.f32 %v1300, %v1419
      %v1421 = vpop.f32.mrf.mxu0
      %v1422 = vadd.f32 %v1300, %v1421
      %1423 = vmatmul.bf16.gmra.mxu0 %v1276
      %v1424 = vpop.f32.mrf.mxu0
      %v1425 = vadd.f32 %v1300, %v1424
      %v1426 = vpop.f32.mrf.mxu0
      %v1427 = vadd.f32 %v1300, %v1426
      %1428 = vmatmul.bf16.gmra.mxu0 %v1278
      %v1429 = vpop.f32.mrf.mxu0
      %v1430 = vadd.f32 %v1300, %v1429
      %v1431 = vpop.f32.mrf.mxu0
      %v1432 = vadd.f32 %v1300, %v1431
      %1433 = vmatmul.bf16.gmra.mxu0 %v1280
      %v1434 = vpop.f32.mrf.mxu0
      %v1435 = vadd.f32 %v1300, %v1434
      %v1436 = vpop.f32.mrf.mxu0
      %v1437 = vadd.f32 %v1300, %v1436
      %1438 = vdwg.mxu0
      %v1439 = vpack.c.bf16 %v1360, %v1360
      %v1440 = vpack.c.bf16 %v1362, %v1362
      %v1441 = vpack.c.bf16 %v1365, %v1365
      %v1442 = vpack.c.bf16 %v1367, %v1367
      %v1443 = vpack.c.bf16 %v1370, %v1370
      %v1444 = vpack.c.bf16 %v1372, %v1372
      %v1445 = vpack.c.bf16 %v1375, %v1375
      %v1446 = vpack.c.bf16 %v1377, %v1377
      %v1447 = vpack.c.bf16 %v1380, %v1380
      %v1448 = vpack.c.bf16 %v1382, %v1382
      %v1449 = vpack.c.bf16 %v1385, %v1385
      %v1450 = vpack.c.bf16 %v1387, %v1387
      %v1451 = vpack.c.bf16 %v1390, %v1390
      %v1452 = vpack.c.bf16 %v1392, %v1392
      %v1453 = vpack.c.bf16 %v1395, %v1395
      %v1454 = vpack.c.bf16 %v1397, %v1397
      %v1455 = vpack.c.bf16 %v1400, %v1400
      %v1456 = vpack.c.bf16 %v1402, %v1402
      %v1457 = vpack.c.bf16 %v1405, %v1405
      %v1458 = vpack.c.bf16 %v1407, %v1407
      %v1459 = vpack.c.bf16 %v1410, %v1410
      %v1460 = vpack.c.bf16 %v1412, %v1412
      %v1461 = vpack.c.bf16 %v1415, %v1415
      %v1462 = vpack.c.bf16 %v1417, %v1417
      %v1463 = vpack.c.bf16 %v1420, %v1420
      %v1464 = vpack.c.bf16 %v1422, %v1422
      %v1465 = vpack.c.bf16 %v1425, %v1425
      %v1466 = vpack.c.bf16 %v1427, %v1427
      %v1467 = vpack.c.bf16 %v1430, %v1430
      %v1468 = vpack.c.bf16 %v1432, %v1432
      %v1469 = vpack.c.bf16 %v1435, %v1435
      %v1470 = vpack.c.bf16 %v1437, %v1437
      %1471 = vst [vmem:[%s251] sm:$0xf] %v1439
      %1472 = vst [vmem:[%s251 + $0x4] sm:$0xf] %v1440
      %1473 = vst [vmem:[%s251 + $0x8] sm:$0xf] %v1441
      %1474 = vst [vmem:[%s251 + $0xc] sm:$0xf] %v1442
      %1475 = vst [vmem:[%s251 + $0x10] sm:$0xf] %v1443
      %1476 = vst [vmem:[%s251 + $0x14] sm:$0xf] %v1444
      %1477 = vst [vmem:[%s251 + $0x18] sm:$0xf] %v1445
      %1478 = vst [vmem:[%s251 + $0x1c] sm:$0xf] %v1446
      %1479 = vst [vmem:[%s251 + $0x20] sm:$0xf] %v1447
      %1480 = vst [vmem:[%s251 + $0x24] sm:$0xf] %v1448
      %1481 = vst [vmem:[%s251 + $0x28] sm:$0xf] %v1449
      %1482 = vst [vmem:[%s251 + $0x2c] sm:$0xf] %v1450
      %1483 = vst [vmem:[%s251 + $0x30] sm:$0xf] %v1451
      %1484 = vst [vmem:[%s251 + $0x34] sm:$0xf] %v1452
      %1485 = vst [vmem:[%s251 + $0x38] sm:$0xf] %v1453
      %1486 = vst [vmem:[%s251 + $0x3c] sm:$0xf] %v1454
      %1487 = vst [vmem:[%s251 + $0x40] sm:$0xf] %v1455
      %1488 = vst [vmem:[%s251 + $0x44] sm:$0xf] %v1456
      %1489 = vst [vmem:[%s251 + $0x48] sm:$0xf] %v1457
      %1490 = vst [vmem:[%s251 + $0x4c] sm:$0xf] %v1458
      %1491 = vst [vmem:[%s251 + $0x50] sm:$0xf] %v1459
      %1492 = vst [vmem:[%s251 + $0x54] sm:$0xf] %v1460
      %1493 = vst [vmem:[%s251 + $0x58] sm:$0xf] %v1461
      %1494 = vst [vmem:[%s251 + $0x5c] sm:$0xf] %v1462
      %1495 = vst [vmem:[%s251 + $0x60] sm:$0xf] %v1463
      %1496 = vst [vmem:[%s251 + $0x64] sm:$0xf] %v1464
      %1497 = vst [vmem:[%s251 + $0x68] sm:$0xf] %v1465
      %1498 = vst [vmem:[%s251 + $0x6c] sm:$0xf] %v1466
      %1499 = vst [vmem:[%s251 + $0x70] sm:$0xf] %v1467
      %1500 = vst [vmem:[%s251 + $0x74] sm:$0xf] %v1468
      %1501 = vst [vmem:[%s251 + $0x78] sm:$0xf] %v1469
      %1502 = vst [vmem:[%s251 + $0x7c] sm:$0xf] %v1470
      %v1503 = vadd.f32 %v1360, %v1362
      %v1504 = vadd.f32 %v1503, %v1365
      %v1505 = vadd.f32 %v1504, %v1367
      %v1506 = vadd.f32 %v1505, %v1370
      %v1507 = vadd.f32 %v1506, %v1372
      %v1508 = vadd.f32 %v1507, %v1375
      %v1509 = vadd.f32 %v1508, %v1377
      %v1510 = vadd.f32 %v1509, %v1380
      %v1511 = vadd.f32 %v1510, %v1382
      %v1512 = vadd.f32 %v1511, %v1385
      %v1513 = vadd.f32 %v1512, %v1387
      %v1514 = vadd.f32 %v1513, %v1390
      %v1515 = vadd.f32 %v1514, %v1392
      %v1516 = vadd.f32 %v1515, %v1395
      %v1517 = vadd.f32 %v1516, %v1397
      %v1518 = vadd.f32 %v1517, %v1400
      %v1519 = vadd.f32 %v1518, %v1402
      %v1520 = vadd.f32 %v1519, %v1405
      %v1521 = vadd.f32 %v1520, %v1407
      %v1522 = vadd.f32 %v1521, %v1410
      %v1523 = vadd.f32 %v1522, %v1412
      %v1524 = vadd.f32 %v1523, %v1415
      %v1525 = vadd.f32 %v1524, %v1417
      %v1526 = vadd.f32 %v1525, %v1420
      %v1527 = vadd.f32 %v1526, %v1422
      %v1528 = vadd.f32 %v1527, %v1425
      %v1529 = vadd.f32 %v1528, %v1427
      %v1530 = vadd.f32 %v1529, %v1430
      %v1531 = vadd.f32 %v1530, %v1432
      %v1532 = vadd.f32 %v1531, %v1435
      %v1533 = vadd.f32 %v1532, %v1437
      %v1534 = vrot.slane %v1533, 4
      %v1535 = vadd.f32 %v1533, %v1534
      %v1536 = vrot.slane %v1535, 2
      %v1537 = vadd.f32 %v1535, %v1536
      %v1538 = vrot.slane %v1537, 1
      %v1539 = vadd.f32 %v1537, %v1538
      %v1540 = vmul.f32 %v1539, 0.00390625
      %v1541 = vsub.f32 %v1360, %v1540
      %v1542 = vsub.f32 %v1362, %v1540
      %v1543 = vsub.f32 %v1365, %v1540
      %v1544 = vsub.f32 %v1367, %v1540
      %v1545 = vsub.f32 %v1370, %v1540
      %v1546 = vsub.f32 %v1372, %v1540
      %v1547 = vsub.f32 %v1375, %v1540
      %v1548 = vsub.f32 %v1377, %v1540
      %v1549 = vsub.f32 %v1380, %v1540
      %v1550 = vsub.f32 %v1382, %v1540
      %v1551 = vsub.f32 %v1385, %v1540
      %v1552 = vsub.f32 %v1387, %v1540
      %v1553 = vsub.f32 %v1390, %v1540
      %v1554 = vsub.f32 %v1392, %v1540
      %v1555 = vsub.f32 %v1395, %v1540
      %v1556 = vsub.f32 %v1397, %v1540
      %v1557 = vsub.f32 %v1400, %v1540
      %v1558 = vsub.f32 %v1402, %v1540
      %v1559 = vsub.f32 %v1405, %v1540
      %v1560 = vsub.f32 %v1407, %v1540
      %v1561 = vsub.f32 %v1410, %v1540
      %v1562 = vsub.f32 %v1412, %v1540
      %v1563 = vsub.f32 %v1415, %v1540
      %v1564 = vsub.f32 %v1417, %v1540
      %v1565 = vsub.f32 %v1420, %v1540
      %v1566 = vsub.f32 %v1422, %v1540
      %v1567 = vsub.f32 %v1425, %v1540
      %v1568 = vsub.f32 %v1427, %v1540
      %v1569 = vsub.f32 %v1430, %v1540
      %v1570 = vsub.f32 %v1432, %v1540
      %v1571 = vsub.f32 %v1435, %v1540
      %v1572 = vsub.f32 %v1437, %v1540
      %1573 = vst [vmem:[%s255] sm:$0x1] %v1539
      %v1574 = vmul.f32 %v1541, %v1541
      %v1575 = vmul.f32 %v1542, %v1542
      %v1576 = vmul.f32 %v1543, %v1543
      %v1577 = vmul.f32 %v1544, %v1544
      %v1578 = vmul.f32 %v1545, %v1545
      %v1579 = vmul.f32 %v1546, %v1546
      %v1580 = vmul.f32 %v1547, %v1547
      %v1581 = vmul.f32 %v1548, %v1548
      %v1582 = vmul.f32 %v1549, %v1549
      %v1583 = vmul.f32 %v1550, %v1550
      %v1584 = vmul.f32 %v1551, %v1551
      %v1585 = vmul.f32 %v1552, %v1552
      %v1586 = vmul.f32 %v1553, %v1553
      %v1587 = vmul.f32 %v1554, %v1554
      %v1588 = vmul.f32 %v1555, %v1555
      %v1589 = vmul.f32 %v1556, %v1556
      %v1590 = vmul.f32 %v1557, %v1557
      %v1591 = vmul.f32 %v1558, %v1558
      %v1592 = vmul.f32 %v1559, %v1559
      %v1593 = vmul.f32 %v1560, %v1560
      %v1594 = vmul.f32 %v1561, %v1561
      %v1595 = vmul.f32 %v1562, %v1562
      %v1596 = vmul.f32 %v1563, %v1563
      %v1597 = vmul.f32 %v1564, %v1564
      %v1598 = vmul.f32 %v1565, %v1565
      %v1599 = vmul.f32 %v1566, %v1566
      %v1600 = vmul.f32 %v1567, %v1567
      %v1601 = vmul.f32 %v1568, %v1568
      %v1602 = vmul.f32 %v1569, %v1569
      %v1603 = vmul.f32 %v1570, %v1570
      %v1604 = vmul.f32 %v1571, %v1571
      %v1605 = vmul.f32 %v1572, %v1572
      %v1606 = vadd.f32 %v1574, %v1575
      %v1607 = vadd.f32 %v1606, %v1576
      %v1608 = vadd.f32 %v1607, %v1577
      %v1609 = vadd.f32 %v1608, %v1578
      %v1610 = vadd.f32 %v1609, %v1579
      %v1611 = vadd.f32 %v1610, %v1580
      %v1612 = vadd.f32 %v1611, %v1581
      %v1613 = vadd.f32 %v1612, %v1582
      %v1614 = vadd.f32 %v1613, %v1583
      %v1615 = vadd.f32 %v1614, %v1584
      %v1616 = vadd.f32 %v1615, %v1585
      %v1617 = vadd.f32 %v1616, %v1586
      %v1618 = vadd.f32 %v1617, %v1587
      %v1619 = vadd.f32 %v1618, %v1588
      %v1620 = vadd.f32 %v1619, %v1589
      %v1621 = vadd.f32 %v1620, %v1590
      %v1622 = vadd.f32 %v1621, %v1591
      %v1623 = vadd.f32 %v1622, %v1592
      %v1624 = vadd.f32 %v1623, %v1593
      %v1625 = vadd.f32 %v1624, %v1594
      %v1626 = vadd.f32 %v1625, %v1595
      %v1627 = vadd.f32 %v1626, %v1596
      %v1628 = vadd.f32 %v1627, %v1597
      %v1629 = vadd.f32 %v1628, %v1598
      %v1630 = vadd.f32 %v1629, %v1599
      %v1631 = vadd.f32 %v1630, %v1600
      %v1632 = vadd.f32 %v1631, %v1601
      %v1633 = vadd.f32 %v1632, %v1602
      %v1634 = vadd.f32 %v1633, %v1603
      %v1635 = vadd.f32 %v1634, %v1604
      %v1636 = vadd.f32 %v1635, %v1605
      %v1637 = vrot.slane %v1636, 4
      %v1638 = vadd.f32 %v1636, %v1637
      %v1639 = vrot.slane %v1638, 2
      %v1640 = vadd.f32 %v1638, %v1639
      %v1641 = vrot.slane %v1640, 1
      %v1642 = vadd.f32 %v1640, %v1641
      %1643 = vst [vmem:[%s255 + $0x1] sm:$0x1] %v1642
      %p1644 = scmp.lt.s32.totalorder %s17, 1
      %s1645 = scalar_select %p1644, %s17, 1
      %s1646 = smul.addr %s1645, 32
      %s1647 = smul.addr %s1646, 4
      %s1648 = scalar_lea.vmem %s4, %s1647
      %p1649 = scmp.lt.s32.totalorder %s17, 1
      %s1650 = scalar_select %p1649, %s17, 1
      %s1651 = smul.addr %s1650, 2
      %s1652 = scalar_lea.vmem %s5, %s1651
      // Predicated region
      $region37: #{vgg_conv_transpose.2} parent=35 // pred_check
        %p1653 = pneg %p129
      $region38: #{vgg_conv_transpose.2} parent=35 // pred_check_branch
        %1655 = sbr.rel (%p1653) target = $region40
      $region39: #{vgg_conv_transpose.2} parent=35 // pred_region
        _
      $region40: #{vgg_conv_transpose.2} parent=35 // pred_fallthru
        _
      // Predicated region
      $region41: #{vgg_conv_transpose.2} parent=35 // pred_check
        %p1656 = pneg %p155
      $region42: #{vgg_conv_transpose.2} parent=35 // pred_check_branch
        %1658 = sbr.rel (%p1656) target = $region44
      $region43: #{vgg_conv_transpose.2} parent=35 // pred_region
        _
      $region44: #{vgg_conv_transpose.2} parent=35 // pred_fallthru
        _
    $region36: #{vgg_conv_transpose.2} parent=5 // pred_fallthru
      _
    %p1659 = scmp.le.s32.totalorder 2, %s12
    // Predicated region
    $region45: #{vgg_conv_transpose.2} parent=5 // pred_check
      %p1660 = pneg %p1659
    $region46: #{vgg_conv_transpose.2} parent=5 // pred_check_branch
      %1662 = sbr.rel (%p1660) target = $region48
    $region47: #{vgg_conv_transpose.2} parent=5 // pred_region
      %s1663 = ssub.s32 %s12, 2
      // Predicated region
      $region49: #{vgg_conv_transpose.2} parent=47 // pred_check
        %p1664 = pneg %p135
      $region50: #{vgg_conv_transpose.2} parent=47 // pred_check_branch
        %1666 = sbr.rel (%p1664) target = $region52
      $region51: #{vgg_conv_transpose.2} parent=47 // pred_region
        %p1667 = scmp.lt.s32.totalorder %s18, 1
        %s1668 = scalar_select %p1667, %s18, 1
        %s1669 = smul.addr %s1668, 32
        %s1670 = smul.addr %s1669, 4
        %s1671 = scalar_lea.vmem %s4, %s1670
      $region52: #{vgg_conv_transpose.2} parent=47 // pred_fallthru
        _
      // Predicated region
      $region53: #{vgg_conv_transpose.2} parent=47 // pred_check
        %p1672 = pneg %p161
      $region54: #{vgg_conv_transpose.2} parent=47 // pred_check_branch
        %1674 = sbr.rel (%p1672) target = $region56
      $region55: #{vgg_conv_transpose.2} parent=47 // pred_region
        %p1675 = scmp.lt.s32.totalorder %s18, 1
        %s1676 = scalar_select %p1675, %s18, 1
        %s1677 = smul.addr %s1676, 2
        %s1678 = scalar_lea.vmem %s5, %s1677
      $region56: #{vgg_conv_transpose.2} parent=47 // pred_fallthru
        _
    $region48: #{vgg_conv_transpose.2} parent=5 // pred_fallthru
      _
  $region6: #{vgg_conv_transpose.2} parent=0 // loop_footer
    %s16 = sadd.s32 1, %s12
  $region7: #{vgg_conv_transpose.2} parent=0 // loop_footer_branch
    %11 = sbr.rel target = $region3
  $region8: #{vgg_conv_transpose.2} parent=0 // loop_exit
    _

</llo_original>
